<compile_context>
chip_gen: v6e
topology: v6e:2x2x1
jax: 0.10.0
libtpu: 0.0.40
codegen_flags: <defaults>
</compile_context>

<pallas_src>
import functools

import jax
import jax.numpy as jnp
from jax.experimental import pallas as pl
from jax.experimental.pallas import tpu as pltpu

D_IN = 784           # feature dim (last block dim == full array dim -> no 128 padding needed)
TM_DEFAULT = 512     # batch tile (clamped below so the grid has >= 2 steps)

# Per fused layer (encoder_lin4/decoder_lin1 merged): in_dim, out_dim, relu?
_LAYER_IN_DIMS = (D_IN, 128, 64, 12, 12, 64, 128)
_LAYER_OUT_DIMS = (128, 64, 12, 12, 64, 128, D_IN)
_LAYER_RELU = (True, True, True, True, True, True, False)


def _linear_ae_kernel(x_ref,
                      w1_ref, w2_ref, w3_ref, w45_ref, w6_ref, w7_ref, w8_ref,
                      b_ref, o_ref):
    """One batch tile: 7 fused Linear(+ReLU) layers, bf16 matmuls, f32 accumulate."""
    w_refs = (w1_ref, w2_ref, w3_ref, w45_ref, w6_ref, w7_ref, w8_ref)

    h = x_ref[...].astype(jnp.bfloat16)              # (TM, 784) f32 -> bf16 in-kernel
    for i, w_ref in enumerate(w_refs):
        out_dim = _LAYER_OUT_DIMS[i]
        acc = jnp.dot(h, w_ref[...], preferred_element_type=jnp.float32)
        acc = acc + b_ref[i:i + 1, :out_dim]         # f32 bias add (broadcast over rows)
        if _LAYER_RELU[i]:
            acc = jnp.maximum(acc, 0.0)              # f32 ReLU (v5e has no bf16 VPU)
        if i + 1 < len(w_refs):
            h = acc.astype(jnp.bfloat16)             # bf16 for the next MXU pass
        else:
            o_ref[...] = acc.astype(o_ref.dtype)     # final layer: store


def prepare_operands(params):
    """Torch-layout params [(W(out,in), b(out,)) x 8] -> kernel-ready operands.

    Call once and reuse: returns 7 bf16 (in,out) weights (enc4/dec1 fused) and a
    single (7, 784) f32 bias slab.
    """
    ws = [w.T.astype(jnp.float32) for (w, _) in params]      # (in, out)
    bs = [b.astype(jnp.float32) for (_, b) in params]

    # Fuse encoder_lin4 (12->3) and decoder_lin1 (3->12): no activation between them.
    w45 = ws[3] @ ws[4]                  # (12, 12)
    b45 = bs[3] @ ws[4] + bs[4]          # (12,)
    ws = [ws[0], ws[1], ws[2], w45, ws[5], ws[6], ws[7]]
    bs = [bs[0], bs[1], bs[2], b45, bs[5], bs[6], bs[7]]

    w_ops = tuple(w.astype(jnp.bfloat16) for w in ws)
    b_slab = jnp.stack([jnp.pad(b, (0, D_IN - b.shape[0])) for b in bs])   # (7, 784) f32
    return w_ops, b_slab


def _round_up(x, m):
    return ((x + m - 1) // m) * m


@functools.partial(jax.jit, static_argnames=("tm", "out_dtype"))
def linear_ae_forward(x, w_ops, b_slab, tm=TM_DEFAULT, out_dtype=jnp.float32):
    """x: (B, 784) float32. w_ops/b_slab: outputs of prepare_operands()."""
    B = x.shape[0]

    # Keep at least 2 grid steps so the "parallel" batch axis can shard across both
    # TensorCores on v7x (harmless on single-TC v5e/v6e); keep tm sublane-aligned.
    tm = max(8, min(tm, _round_up(pl.cdiv(B, 2), 8)))
    n_tiles = pl.cdiv(B, tm)
    b_padded = n_tiles * tm
    x_in = x if b_padded == B else jnp.pad(x, ((0, b_padded - B), (0, 0)))

    in_specs = (
        [pl.BlockSpec((tm, D_IN), lambda i: (i, 0))]                  # x tile
        + [pl.BlockSpec(w.shape, lambda i: (0, 0)) for w in w_ops]    # resident weights
        + [pl.BlockSpec(b_slab.shape, lambda i: (0, 0))]              # resident bias slab
    )
    out_specs = pl.BlockSpec((tm, D_IN), lambda i: (i, 0))

    flops = 2 * b_padded * sum(di * do for di, do in zip(_LAYER_IN_DIMS, _LAYER_OUT_DIMS))
    weight_bytes = sum(int(w.size) * 2 for w in w_ops) + int(b_slab.size) * 4
    bytes_accessed = (b_padded * D_IN * (x.dtype.itemsize + jnp.dtype(out_dtype).itemsize)
                      + weight_bytes)

    out = pl.pallas_call(
        _linear_ae_kernel,
        out_shape=jax.ShapeDtypeStruct((b_padded, D_IN), out_dtype),
        grid=(n_tiles,),
        in_specs=in_specs,
        out_specs=out_specs,
        compiler_params=pltpu.CompilerParams(
            dimension_semantics=("parallel",),
            vmem_limit_bytes=32 * 1024 * 1024,
        ),
        cost_estimate=pl.CostEstimate(
            flops=flops, transcendentals=0, bytes_accessed=bytes_accessed),
    )(x_in, *w_ops, b_slab)

    return out if b_padded == B else out[:B]


def init_params(key):
    """Deterministic PyTorch-style init: U(-1/sqrt(fan_in), 1/sqrt(fan_in)), torch layout."""
    dims = [(784, 128), (128, 64), (64, 12), (12, 3),
            (3, 12), (12, 64), (64, 128), (128, 784)]
    params = []
    for fan_in, fan_out in dims:
        key, kw, kb = jax.random.split(key, 3)
        bound = 1.0 / jnp.sqrt(jnp.float32(fan_in))
        w = jax.random.uniform(kw, (fan_out, fan_in), jnp.float32, -bound, bound)  # (out, in)
        b = jax.random.uniform(kb, (fan_out,), jnp.float32, -bound, bound)
        params.append((w, b))
    return params


def reference_forward(x, params):
    """Pure-JAX reference mirroring the kernel's bf16-weight / f32-accumulate flow
    (unfused layers — validates the enc4/dec1 fusion done inside prepare_operands)."""
    h = x.astype(jnp.bfloat16)
    n = len(params)
    for i, (w, b) in enumerate(params):
        w_t = w.T.astype(jnp.bfloat16)
        h = jnp.dot(h, w_t, preferred_element_type=jnp.float32) + b.astype(jnp.float32)
        if i not in (3, 7):          # ReLU after every layer except encoder_lin4 / decoder_lin4
            h = jnp.maximum(h, 0.0)
        if i + 1 < n:
            h = h.astype(jnp.bfloat16)
    return h


if __name__ == "__main__":
    key = jax.random.PRNGKey(0)
    kx, kp = jax.random.split(key)

    B = 256  # small; tm clamps to 128 -> 2 grid steps (exercises the pipelined batch grid)
    x = jax.random.normal(kx, (B, D_IN), jnp.float32)
    params = init_params(kp)

    # Hoisted operand prep: done once, reused for every forward call.
    w_ops, b_slab = prepare_operands(params)

    out = jax.block_until_ready(linear_ae_forward(x, w_ops, b_slab))
    ref = reference_forward(x, params)

    assert out.shape == (B, D_IN), out.shape
    max_err = float(jnp.max(jnp.abs(out - ref)))
    assert jnp.allclose(out, ref, atol=3e-2, rtol=3e-2), max_err

    print("KERNEL_OK")
</pallas_src>

<mosaic_0001>
module attributes {stable_mosaic.version = 11 : i64} {
  func.func @_linear_ae_kernel(%arg0: i32, %arg1: memref<128x784xf32, #tpu.memory_space<vmem>>, %arg2: memref<784x128xbf16, #tpu.memory_space<vmem>>, %arg3: memref<128x64xbf16, #tpu.memory_space<vmem>>, %arg4: memref<64x12xbf16, #tpu.memory_space<vmem>>, %arg5: memref<12x12xbf16, #tpu.memory_space<vmem>>, %arg6: memref<12x64xbf16, #tpu.memory_space<vmem>>, %arg7: memref<64x128xbf16, #tpu.memory_space<vmem>>, %arg8: memref<128x784xbf16, #tpu.memory_space<vmem>>, %arg9: memref<7x784xf32, #tpu.memory_space<vmem>>, %arg10: memref<128x784xf32, #tpu.memory_space<vmem>>) attributes {dimension_semantics = [#tpu.dimension_semantics<parallel>], iteration_bounds = array<i64: 2>, scalar_prefetch = 0 : i64, scratch_operands = 0 : i64, tpu.core_type = #tpu.core_type<tc>, window_params = [{transform_indices = @transform_0, window_bounds = array<i64: 128, 784>}, {pipeline_mode = #tpu.pipeline_mode<synchronous>, transform_indices = @transform_1, window_bounds = array<i64: 784, 128>}, {pipeline_mode = #tpu.pipeline_mode<synchronous>, transform_indices = @transform_2, window_bounds = array<i64: 128, 64>}, {pipeline_mode = #tpu.pipeline_mode<synchronous>, transform_indices = @transform_3, window_bounds = array<i64: 64, 12>}, {pipeline_mode = #tpu.pipeline_mode<synchronous>, transform_indices = @transform_4, window_bounds = array<i64: 12, 12>}, {pipeline_mode = #tpu.pipeline_mode<synchronous>, transform_indices = @transform_5, window_bounds = array<i64: 12, 64>}, {pipeline_mode = #tpu.pipeline_mode<synchronous>, transform_indices = @transform_6, window_bounds = array<i64: 64, 128>}, {pipeline_mode = #tpu.pipeline_mode<synchronous>, transform_indices = @transform_7, window_bounds = array<i64: 128, 784>}, {pipeline_mode = #tpu.pipeline_mode<synchronous>, transform_indices = @transform_8, window_bounds = array<i64: 7, 784>}, {transform_indices = @transform_9, window_bounds = array<i64: 128, 784>}]} {
    %c0 = arith.constant 0 : index
    %c0_0 = arith.constant 0 : index
    %0 = vector.load %arg1[%c0, %c0_0] : memref<128x784xf32, #tpu.memory_space<vmem>>, vector<128x784xf32>
    %1 = arith.truncf %0 : vector<128x784xf32> to vector<128x784xbf16>
    %c0_1 = arith.constant 0 : index
    %c0_2 = arith.constant 0 : index
    %2 = vector.load %arg2[%c0_1, %c0_2] : memref<784x128xbf16, #tpu.memory_space<vmem>>, vector<784x128xbf16>
    %cst = arith.constant dense<0.000000e+00> : vector<128x128xf32>
    %3 = tpu.matmul %1, %2, %cst {dimension_numbers = #tpu.dot_dimension_numbers<[1], [0], [0], [1], [0, 0, 1, 1], [], []>} : vector<128x784xbf16>, vector<784x128xbf16>, vector<128x128xf32> -> vector<128x128xf32>
    %c0_3 = arith.constant 0 : index
    %c0_4 = arith.constant 0 : index
    %4 = vector.load %arg9[%c0_3, %c0_4] : memref<7x784xf32, #tpu.memory_space<vmem>>, vector<1x128xf32>
    %5 = vector.broadcast %4 : vector<1x128xf32> to vector<128x128xf32>
    %6 = arith.addf %3, %5 : vector<128x128xf32>
    %cst_5 = arith.constant 0.000000e+00 : f32
    %7 = vector.broadcast %cst_5 : f32 to vector<128x128xf32>
    %8 = arith.maximumf %6, %7 : vector<128x128xf32>
    %9 = arith.truncf %8 : vector<128x128xf32> to vector<128x128xbf16>
    %c0_6 = arith.constant 0 : index
    %c0_7 = arith.constant 0 : index
    %10 = vector.load %arg3[%c0_6, %c0_7] : memref<128x64xbf16, #tpu.memory_space<vmem>>, vector<128x64xbf16>
    %cst_8 = arith.constant dense<0.000000e+00> : vector<128x64xf32>
    %11 = tpu.matmul %9, %10, %cst_8 {dimension_numbers = #tpu.dot_dimension_numbers<[1], [0], [0], [1], [0, 0, 1, 1], [], []>} : vector<128x128xbf16>, vector<128x64xbf16>, vector<128x64xf32> -> vector<128x64xf32>
    %c1 = arith.constant 1 : index
    %c0_9 = arith.constant 0 : index
    %12 = vector.load %arg9[%c1, %c0_9] : memref<7x784xf32, #tpu.memory_space<vmem>>, vector<1x64xf32>
    %13 = vector.broadcast %12 : vector<1x64xf32> to vector<128x64xf32>
    %14 = arith.addf %11, %13 : vector<128x64xf32>
    %cst_10 = arith.constant 0.000000e+00 : f32
    %15 = vector.broadcast %cst_10 : f32 to vector<128x64xf32>
    %16 = arith.maximumf %14, %15 : vector<128x64xf32>
    %17 = arith.truncf %16 : vector<128x64xf32> to vector<128x64xbf16>
    %c0_11 = arith.constant 0 : index
    %c0_12 = arith.constant 0 : index
    %18 = vector.load %arg4[%c0_11, %c0_12] : memref<64x12xbf16, #tpu.memory_space<vmem>>, vector<64x12xbf16>
    %cst_13 = arith.constant dense<0.000000e+00> : vector<128x12xf32>
    %19 = tpu.matmul %17, %18, %cst_13 {dimension_numbers = #tpu.dot_dimension_numbers<[1], [0], [0], [1], [0, 0, 1, 1], [], []>} : vector<128x64xbf16>, vector<64x12xbf16>, vector<128x12xf32> -> vector<128x12xf32>
    %c2 = arith.constant 2 : index
    %c0_14 = arith.constant 0 : index
    %20 = vector.load %arg9[%c2, %c0_14] : memref<7x784xf32, #tpu.memory_space<vmem>>, vector<1x12xf32>
    %21 = vector.broadcast %20 : vector<1x12xf32> to vector<128x12xf32>
    %22 = arith.addf %19, %21 : vector<128x12xf32>
    %cst_15 = arith.constant 0.000000e+00 : f32
    %23 = vector.broadcast %cst_15 : f32 to vector<128x12xf32>
    %24 = arith.maximumf %22, %23 : vector<128x12xf32>
    %25 = arith.truncf %24 : vector<128x12xf32> to vector<128x12xbf16>
    %c0_16 = arith.constant 0 : index
    %c0_17 = arith.constant 0 : index
    %26 = vector.load %arg5[%c0_16, %c0_17] : memref<12x12xbf16, #tpu.memory_space<vmem>>, vector<12x12xbf16>
    %cst_18 = arith.constant dense<0.000000e+00> : vector<128x12xf32>
    %27 = tpu.matmul %25, %26, %cst_18 {dimension_numbers = #tpu.dot_dimension_numbers<[1], [0], [0], [1], [0, 0, 1, 1], [], []>} : vector<128x12xbf16>, vector<12x12xbf16>, vector<128x12xf32> -> vector<128x12xf32>
    %c3 = arith.constant 3 : index
    %c0_19 = arith.constant 0 : index
    %28 = vector.load %arg9[%c3, %c0_19] : memref<7x784xf32, #tpu.memory_space<vmem>>, vector<1x12xf32>
    %29 = vector.broadcast %28 : vector<1x12xf32> to vector<128x12xf32>
    %30 = arith.addf %27, %29 : vector<128x12xf32>
    %cst_20 = arith.constant 0.000000e+00 : f32
    %31 = vector.broadcast %cst_20 : f32 to vector<128x12xf32>
    %32 = arith.maximumf %30, %31 : vector<128x12xf32>
    %33 = arith.truncf %32 : vector<128x12xf32> to vector<128x12xbf16>
    %c0_21 = arith.constant 0 : index
    %c0_22 = arith.constant 0 : index
    %34 = vector.load %arg6[%c0_21, %c0_22] : memref<12x64xbf16, #tpu.memory_space<vmem>>, vector<12x64xbf16>
    %cst_23 = arith.constant dense<0.000000e+00> : vector<128x64xf32>
    %35 = tpu.matmul %33, %34, %cst_23 {dimension_numbers = #tpu.dot_dimension_numbers<[1], [0], [0], [1], [0, 0, 1, 1], [], []>} : vector<128x12xbf16>, vector<12x64xbf16>, vector<128x64xf32> -> vector<128x64xf32>
    %c4 = arith.constant 4 : index
    %c0_24 = arith.constant 0 : index
    %36 = vector.load %arg9[%c4, %c0_24] : memref<7x784xf32, #tpu.memory_space<vmem>>, vector<1x64xf32>
    %37 = vector.broadcast %36 : vector<1x64xf32> to vector<128x64xf32>
    %38 = arith.addf %35, %37 : vector<128x64xf32>
    %cst_25 = arith.constant 0.000000e+00 : f32
    %39 = vector.broadcast %cst_25 : f32 to vector<128x64xf32>
    %40 = arith.maximumf %38, %39 : vector<128x64xf32>
    %41 = arith.truncf %40 : vector<128x64xf32> to vector<128x64xbf16>
    %c0_26 = arith.constant 0 : index
    %c0_27 = arith.constant 0 : index
    %42 = vector.load %arg7[%c0_26, %c0_27] : memref<64x128xbf16, #tpu.memory_space<vmem>>, vector<64x128xbf16>
    %cst_28 = arith.constant dense<0.000000e+00> : vector<128x128xf32>
    %43 = tpu.matmul %41, %42, %cst_28 {dimension_numbers = #tpu.dot_dimension_numbers<[1], [0], [0], [1], [0, 0, 1, 1], [], []>} : vector<128x64xbf16>, vector<64x128xbf16>, vector<128x128xf32> -> vector<128x128xf32>
    %c5 = arith.constant 5 : index
    %c0_29 = arith.constant 0 : index
    %44 = vector.load %arg9[%c5, %c0_29] : memref<7x784xf32, #tpu.memory_space<vmem>>, vector<1x128xf32>
    %45 = vector.broadcast %44 : vector<1x128xf32> to vector<128x128xf32>
    %46 = arith.addf %43, %45 : vector<128x128xf32>
    %cst_30 = arith.constant 0.000000e+00 : f32
    %47 = vector.broadcast %cst_30 : f32 to vector<128x128xf32>
    %48 = arith.maximumf %46, %47 : vector<128x128xf32>
    %49 = arith.truncf %48 : vector<128x128xf32> to vector<128x128xbf16>
    %c0_31 = arith.constant 0 : index
    %c0_32 = arith.constant 0 : index
    %50 = vector.load %arg8[%c0_31, %c0_32] : memref<128x784xbf16, #tpu.memory_space<vmem>>, vector<128x784xbf16>
    %cst_33 = arith.constant dense<0.000000e+00> : vector<128x784xf32>
    %51 = tpu.matmul %49, %50, %cst_33 {dimension_numbers = #tpu.dot_dimension_numbers<[1], [0], [0], [1], [0, 0, 1, 1], [], []>} : vector<128x128xbf16>, vector<128x784xbf16>, vector<128x784xf32> -> vector<128x784xf32>
    %c6 = arith.constant 6 : index
    %c0_34 = arith.constant 0 : index
    %52 = vector.load %arg9[%c6, %c0_34] : memref<7x784xf32, #tpu.memory_space<vmem>>, vector<1x784xf32>
    %53 = vector.broadcast %52 : vector<1x784xf32> to vector<128x784xf32>
    %54 = arith.addf %51, %53 : vector<128x784xf32>
    %c0_35 = arith.constant 0 : index
    %c0_36 = arith.constant 0 : index
    %55 = vector.load %arg10[%c0_35, %c0_36] : memref<128x784xf32, #tpu.memory_space<vmem>>, vector<128x784xf32>
    tpu.vector_store %arg10[%c0_35, %c0_36], %54 {strides = array<i32>} : memref<128x784xf32, #tpu.memory_space<vmem>>, vector<128x784xf32>,
    return
  }
  func.func @transform_0(%arg0: i32) -> (i32, i32) {
    %c0_i32 = arith.constant 0 : i32
    %c0_i32_0 = arith.constant 0 : i32
    return %arg0, %c0_i32 : i32, i32
  }
  func.func @transform_1(%arg0: i32) -> (i32, i32) {
    %c0_i32 = arith.constant 0 : i32
    %c0_i32_0 = arith.constant 0 : i32
    %c0_i32_1 = arith.constant 0 : i32
    return %c0_i32, %c0_i32_0 : i32, i32
  }
  func.func @transform_2(%arg0: i32) -> (i32, i32) {
    %c0_i32 = arith.constant 0 : i32
    %c0_i32_0 = arith.constant 0 : i32
    %c0_i32_1 = arith.constant 0 : i32
    return %c0_i32, %c0_i32_0 : i32, i32
  }
  func.func @transform_3(%arg0: i32) -> (i32, i32) {
    %c0_i32 = arith.constant 0 : i32
    %c0_i32_0 = arith.constant 0 : i32
    %c0_i32_1 = arith.constant 0 : i32
    return %c0_i32, %c0_i32_0 : i32, i32
  }
  func.func @transform_4(%arg0: i32) -> (i32, i32) {
    %c0_i32 = arith.constant 0 : i32
    %c0_i32_0 = arith.constant 0 : i32
    %c0_i32_1 = arith.constant 0 : i32
    return %c0_i32, %c0_i32_0 : i32, i32
  }
  func.func @transform_5(%arg0: i32) -> (i32, i32) {
    %c0_i32 = arith.constant 0 : i32
    %c0_i32_0 = arith.constant 0 : i32
    %c0_i32_1 = arith.constant 0 : i32
    return %c0_i32, %c0_i32_0 : i32, i32
  }
  func.func @transform_6(%arg0: i32) -> (i32, i32) {
    %c0_i32 = arith.constant 0 : i32
    %c0_i32_0 = arith.constant 0 : i32
    %c0_i32_1 = arith.constant 0 : i32
    return %c0_i32, %c0_i32_0 : i32, i32
  }
  func.func @transform_7(%arg0: i32) -> (i32, i32) {
    %c0_i32 = arith.constant 0 : i32
    %c0_i32_0 = arith.constant 0 : i32
    %c0_i32_1 = arith.constant 0 : i32
    return %c0_i32, %c0_i32_0 : i32, i32
  }
  func.func @transform_8(%arg0: i32) -> (i32, i32) {
    %c0_i32 = arith.constant 0 : i32
    %c0_i32_0 = arith.constant 0 : i32
    %c0_i32_1 = arith.constant 0 : i32
    return %c0_i32, %c0_i32_0 : i32, i32
  }
  func.func @transform_9(%arg0: i32) -> (i32, i32) {
    %c0_i32 = arith.constant 0 : i32
    %c0_i32_0 = arith.constant 0 : i32
    return %arg0, %c0_i32 : i32, i32
  }
}

</mosaic_0001>

<llo_original>
// kernel: linear_ae_forward.1
$region0: #{linear_ae_forward.1}
  #allocation0 [shape = 'u32[]', space=smem, size = 0x4, offset = 0x4, fixed_abs, tag = 'smem constant byte address 0x4 - core index']
  #allocation1 [shape = 'u32[144,128]{1,0:T(1,128)}', space=vmem, size = 0x12000, scoped, tag = 'internal scratch']
  %s0 = inlined_call_operand.vmem [shape: f32[256,784], index: 0, kind: input, shape index: {}]
  %s1 = inlined_call_operand.vmem [shape: bf16[784,128], index: 1, kind: input, shape index: {}]
  %s2 = inlined_call_operand.vmem [shape: bf16[128,64], index: 2, kind: input, shape index: {}]
  %s3 = inlined_call_operand.vmem [shape: bf16[64,12], index: 3, kind: input, shape index: {}]
  %s4 = inlined_call_operand.vmem [shape: bf16[12,12], index: 4, kind: input, shape index: {}]
  %s5 = inlined_call_operand.vmem [shape: bf16[12,64], index: 5, kind: input, shape index: {}]
  %s6 = inlined_call_operand.vmem [shape: bf16[64,128], index: 6, kind: input, shape index: {}]
  %s7 = inlined_call_operand.vmem [shape: bf16[128,784], index: 7, kind: input, shape index: {}]
  %s8 = inlined_call_operand.vmem [shape: f32[7,784], index: 8, kind: input, shape index: {}]
  %s9 = inlined_call_operand.vmem [shape: f32[256,784], index: 9, kind: output, shape index: {}]
  %s10 = sld [smem:[#allocation0]]
  $region69: #{linear_ae_forward.1} parent=0
    _
  %s12 = ssub.s32 1, %s10
  %s13 = scalar_select 0, %s12, %s10
  loop: start=0, step=1, limit=4
  $region2: #{linear_ae_forward.1} parent=0 // loop_pre_header
    _
  $region3: #{linear_ae_forward.1} parent=0 // loop_header
    %s15 = sphi 0, %s19
    %p16 = scmp.ge.s32.totalorder %s15, 4
    %s25 = sphi 0, %s27
    %s28 = sphi 0, %s25
    %s29 = sphi 0, %s28
    %s45 = sphi 0, %s29
    %s49 = sphi 0, %s49
    %s51 = sphi 0, %s49
    %s52 = sphi 0, %s51
    %s66 = sphi 0, %s52
    %s70 = sphi 0, %s70
    %s72 = sphi 0, %s70
    %s73 = sphi 0, %s72
    %s87 = sphi 0, %s73
    %s91 = sphi 0, %s91
    %s93 = sphi 0, %s91
    %s94 = sphi 0, %s93
    %s108 = sphi 0, %s94
    %s112 = sphi 0, %s112
    %s114 = sphi 0, %s112
    %s115 = sphi 0, %s114
    %s129 = sphi 0, %s115
    %s133 = sphi 0, %s133
    %s135 = sphi 0, %s133
    %s136 = sphi 0, %s135
    %s150 = sphi 0, %s136
    %s154 = sphi 0, %s154
    %s156 = sphi 0, %s154
    %s157 = sphi 0, %s156
    %s171 = sphi 0, %s157
    %s175 = sphi 0, %s175
    %s177 = sphi 0, %s175
    %s178 = sphi 0, %s177
    %s192 = sphi 0, %s178
    %s196 = sphi 0, %s196
    %s198 = sphi 0, %s196
    %s199 = sphi 0, %s198
    %s213 = sphi 0, %s199
    %s219 = sphi 0, %s221
    %s222 = sphi 0, %s219
    %s223 = sphi 0, %s222
    %s239 = sphi 0, %s223
  $region4: #{linear_ae_forward.1} parent=0 // loop_header_branch
    %18 = sbr.rel (%p16) target = $region8
  $region5: #{linear_ae_forward.1} parent=0 // loop_body
    %s20 = ssub.s32 %s15, 1
    %s21 = ssub.s32 %s15, 2
    %s22 = sadd.s32 %s15, 1
    %s23 = ssub.s32 %s15, %s22
    %p24 = scmp.eq.s32.totalorder %s23, 0
    %s26 = sadd.s32 %s25, 1
    %s27 = scalar_select %p24, %s25, %s26
    %p30 = pneg %p24
    %p31 = scmp.eq.s32.totalorder %s15, 1
    %p32 = por %p30, %p31
    %p33 = scmp.ne.s32.totalorder %s25, %s28
    %p34 = scmp.eq.s32.totalorder %s15, 0
    %p35 = por %p33, %p34
    %p36 = scmp.ne.s32.totalorder %s25, %s28
    %p37 = scmp.eq.s32.totalorder %s20, 1
    %p38 = por %p36, %p37
    %p39 = scmp.ne.s32.totalorder %s28, %s29
    %p40 = scmp.eq.s32.totalorder %s20, 0
    %p41 = por %p39, %p40
    %p42 = scmp.ne.s32.totalorder %s28, %s29
    %p43 = scmp.eq.s32.totalorder %s21, 1
    %p44 = por %p42, %p43
    %p46 = scmp.ne.s32.totalorder %s29, %s45
    %p47 = scmp.eq.s32.totalorder %s21, 0
    %p48 = por %p46, %p47
    %s50 = sadd.s32 %s49, 1
    %p53 = scmp.eq.s32.totalorder %s15, 1
    %p54 = scmp.ne.s32.totalorder %s49, %s51
    %p55 = scmp.eq.s32.totalorder %s15, 0
    %p56 = por %p54, %p55
    %p57 = scmp.ne.s32.totalorder %s49, %s51
    %p58 = scmp.eq.s32.totalorder %s20, 1
    %p59 = por %p57, %p58
    %p60 = scmp.ne.s32.totalorder %s51, %s52
    %p61 = scmp.eq.s32.totalorder %s20, 0
    %p62 = por %p60, %p61
    %p63 = scmp.ne.s32.totalorder %s51, %s52
    %p64 = scmp.eq.s32.totalorder %s21, 1
    %p65 = por %p63, %p64
    %p67 = scmp.ne.s32.totalorder %s52, %s66
    %p68 = scmp.eq.s32.totalorder %s21, 0
    %p69 = por %p67, %p68
    %s71 = sadd.s32 %s70, 1
    %p74 = scmp.eq.s32.totalorder %s15, 1
    %p75 = scmp.ne.s32.totalorder %s70, %s72
    %p76 = scmp.eq.s32.totalorder %s15, 0
    %p77 = por %p75, %p76
    %p78 = scmp.ne.s32.totalorder %s70, %s72
    %p79 = scmp.eq.s32.totalorder %s20, 1
    %p80 = por %p78, %p79
    %p81 = scmp.ne.s32.totalorder %s72, %s73
    %p82 = scmp.eq.s32.totalorder %s20, 0
    %p83 = por %p81, %p82
    %p84 = scmp.ne.s32.totalorder %s72, %s73
    %p85 = scmp.eq.s32.totalorder %s21, 1
    %p86 = por %p84, %p85
    %p88 = scmp.ne.s32.totalorder %s73, %s87
    %p89 = scmp.eq.s32.totalorder %s21, 0
    %p90 = por %p88, %p89
    %s92 = sadd.s32 %s91, 1
    %p95 = scmp.eq.s32.totalorder %s15, 1
    %p96 = scmp.ne.s32.totalorder %s91, %s93
    %p97 = scmp.eq.s32.totalorder %s15, 0
    %p98 = por %p96, %p97
    %p99 = scmp.ne.s32.totalorder %s91, %s93
    %p100 = scmp.eq.s32.totalorder %s20, 1
    %p101 = por %p99, %p100
    %p102 = scmp.ne.s32.totalorder %s93, %s94
    %p103 = scmp.eq.s32.totalorder %s20, 0
    %p104 = por %p102, %p103
    %p105 = scmp.ne.s32.totalorder %s93, %s94
    %p106 = scmp.eq.s32.totalorder %s21, 1
    %p107 = por %p105, %p106
    %p109 = scmp.ne.s32.totalorder %s94, %s108
    %p110 = scmp.eq.s32.totalorder %s21, 0
    %p111 = por %p109, %p110
    %s113 = sadd.s32 %s112, 1
    %p116 = scmp.eq.s32.totalorder %s15, 1
    %p117 = scmp.ne.s32.totalorder %s112, %s114
    %p118 = scmp.eq.s32.totalorder %s15, 0
    %p119 = por %p117, %p118
    %p120 = scmp.ne.s32.totalorder %s112, %s114
    %p121 = scmp.eq.s32.totalorder %s20, 1
    %p122 = por %p120, %p121
    %p123 = scmp.ne.s32.totalorder %s114, %s115
    %p124 = scmp.eq.s32.totalorder %s20, 0
    %p125 = por %p123, %p124
    %p126 = scmp.ne.s32.totalorder %s114, %s115
    %p127 = scmp.eq.s32.totalorder %s21, 1
    %p128 = por %p126, %p127
    %p130 = scmp.ne.s32.totalorder %s115, %s129
    %p131 = scmp.eq.s32.totalorder %s21, 0
    %p132 = por %p130, %p131
    %s134 = sadd.s32 %s133, 1
    %p137 = scmp.eq.s32.totalorder %s15, 1
    %p138 = scmp.ne.s32.totalorder %s133, %s135
    %p139 = scmp.eq.s32.totalorder %s15, 0
    %p140 = por %p138, %p139
    %p141 = scmp.ne.s32.totalorder %s133, %s135
    %p142 = scmp.eq.s32.totalorder %s20, 1
    %p143 = por %p141, %p142
    %p144 = scmp.ne.s32.totalorder %s135, %s136
    %p145 = scmp.eq.s32.totalorder %s20, 0
    %p146 = por %p144, %p145
    %p147 = scmp.ne.s32.totalorder %s135, %s136
    %p148 = scmp.eq.s32.totalorder %s21, 1
    %p149 = por %p147, %p148
    %p151 = scmp.ne.s32.totalorder %s136, %s150
    %p152 = scmp.eq.s32.totalorder %s21, 0
    %p153 = por %p151, %p152
    %s155 = sadd.s32 %s154, 1
    %p158 = scmp.eq.s32.totalorder %s15, 1
    %p159 = scmp.ne.s32.totalorder %s154, %s156
    %p160 = scmp.eq.s32.totalorder %s15, 0
    %p161 = por %p159, %p160
    %p162 = scmp.ne.s32.totalorder %s154, %s156
    %p163 = scmp.eq.s32.totalorder %s20, 1
    %p164 = por %p162, %p163
    %p165 = scmp.ne.s32.totalorder %s156, %s157
    %p166 = scmp.eq.s32.totalorder %s20, 0
    %p167 = por %p165, %p166
    %p168 = scmp.ne.s32.totalorder %s156, %s157
    %p169 = scmp.eq.s32.totalorder %s21, 1
    %p170 = por %p168, %p169
    %p172 = scmp.ne.s32.totalorder %s157, %s171
    %p173 = scmp.eq.s32.totalorder %s21, 0
    %p174 = por %p172, %p173
    %s176 = sadd.s32 %s175, 1
    %p179 = scmp.eq.s32.totalorder %s15, 1
    %p180 = scmp.ne.s32.totalorder %s175, %s177
    %p181 = scmp.eq.s32.totalorder %s15, 0
    %p182 = por %p180, %p181
    %p183 = scmp.ne.s32.totalorder %s175, %s177
    %p184 = scmp.eq.s32.totalorder %s20, 1
    %p185 = por %p183, %p184
    %p186 = scmp.ne.s32.totalorder %s177, %s178
    %p187 = scmp.eq.s32.totalorder %s20, 0
    %p188 = por %p186, %p187
    %p189 = scmp.ne.s32.totalorder %s177, %s178
    %p190 = scmp.eq.s32.totalorder %s21, 1
    %p191 = por %p189, %p190
    %p193 = scmp.ne.s32.totalorder %s178, %s192
    %p194 = scmp.eq.s32.totalorder %s21, 0
    %p195 = por %p193, %p194
    %s197 = sadd.s32 %s196, 1
    %p200 = scmp.eq.s32.totalorder %s15, 1
    %p201 = scmp.ne.s32.totalorder %s196, %s198
    %p202 = scmp.eq.s32.totalorder %s15, 0
    %p203 = por %p201, %p202
    %p204 = scmp.ne.s32.totalorder %s196, %s198
    %p205 = scmp.eq.s32.totalorder %s20, 1
    %p206 = por %p204, %p205
    %p207 = scmp.ne.s32.totalorder %s198, %s199
    %p208 = scmp.eq.s32.totalorder %s20, 0
    %p209 = por %p207, %p208
    %p210 = scmp.ne.s32.totalorder %s198, %s199
    %p211 = scmp.eq.s32.totalorder %s21, 1
    %p212 = por %p210, %p211
    %p214 = scmp.ne.s32.totalorder %s199, %s213
    %p215 = scmp.eq.s32.totalorder %s21, 0
    %p216 = por %p214, %p215
    %s217 = ssub.s32 %s15, %s22
    %p218 = scmp.eq.s32.totalorder %s217, 0
    %s220 = sadd.s32 %s219, 1
    %s221 = scalar_select %p218, %s219, %s220
    %p224 = pneg %p218
    %p225 = scmp.eq.s32.totalorder %s15, 1
    %p226 = por %p224, %p225
    %p227 = scmp.ne.s32.totalorder %s219, %s222
    %p228 = scmp.eq.s32.totalorder %s15, 0
    %p229 = por %p227, %p228
    %p230 = scmp.ne.s32.totalorder %s219, %s222
    %p231 = scmp.eq.s32.totalorder %s20, 1
    %p232 = por %p230, %p231
    %p233 = scmp.ne.s32.totalorder %s222, %s223
    %p234 = scmp.eq.s32.totalorder %s20, 0
    %p235 = por %p233, %p234
    %p236 = scmp.ne.s32.totalorder %s222, %s223
    %p237 = scmp.eq.s32.totalorder %s21, 1
    %p238 = por %p236, %p237
    %p240 = scmp.ne.s32.totalorder %s223, %s239
    %p241 = scmp.eq.s32.totalorder %s21, 0
    %p242 = por %p240, %p241
    %p243 = scmp.le.s32.totalorder 1, %s15
    %p244 = scmp.lt.s32.totalorder %s15, 3
    %p245 = pnand %p243, %p244
    %p246 = pneg %p245
    // Predicated region
    $region9: #{linear_ae_forward.1} parent=5 // pred_check
      _
    $region10: #{linear_ae_forward.1} parent=5 // pred_check_branch
      %248 = sbr.rel (%p245) target = $region12
    $region11: #{linear_ae_forward.1} parent=5 // pred_region
      %s249 = ssub.s32 %s15, 1
      // Predicated region
      $region13: #{linear_ae_forward.1} parent=11 // pred_check
        %p250 = pneg %p62
      $region14: #{linear_ae_forward.1} parent=11 // pred_check_branch
        %252 = sbr.rel (%p250) target = $region16
      $region15: #{linear_ae_forward.1} parent=11 // pred_region
        _
      $region16: #{linear_ae_forward.1} parent=11 // pred_fallthru
        _
      // Predicated region
      $region17: #{linear_ae_forward.1} parent=11 // pred_check
        %p253 = pneg %p83
      $region18: #{linear_ae_forward.1} parent=11 // pred_check_branch
        %255 = sbr.rel (%p253) target = $region20
      $region19: #{linear_ae_forward.1} parent=11 // pred_region
        _
      $region20: #{linear_ae_forward.1} parent=11 // pred_fallthru
        _
      // Predicated region
      $region21: #{linear_ae_forward.1} parent=11 // pred_check
        %p256 = pneg %p104
      $region22: #{linear_ae_forward.1} parent=11 // pred_check_branch
        %258 = sbr.rel (%p256) target = $region24
      $region23: #{linear_ae_forward.1} parent=11 // pred_region
        _
      $region24: #{linear_ae_forward.1} parent=11 // pred_fallthru
        _
      // Predicated region
      $region25: #{linear_ae_forward.1} parent=11 // pred_check
        %p259 = pneg %p125
      $region26: #{linear_ae_forward.1} parent=11 // pred_check_branch
        %261 = sbr.rel (%p259) target = $region28
      $region27: #{linear_ae_forward.1} parent=11 // pred_region
        _
      $region28: #{linear_ae_forward.1} parent=11 // pred_fallthru
        _
      // Predicated region
      $region29: #{linear_ae_forward.1} parent=11 // pred_check
        %p262 = pneg %p146
      $region30: #{linear_ae_forward.1} parent=11 // pred_check_branch
        %264 = sbr.rel (%p262) target = $region32
      $region31: #{linear_ae_forward.1} parent=11 // pred_region
        _
      $region32: #{linear_ae_forward.1} parent=11 // pred_fallthru
        _
      // Predicated region
      $region33: #{linear_ae_forward.1} parent=11 // pred_check
        %p265 = pneg %p167
      $region34: #{linear_ae_forward.1} parent=11 // pred_check_branch
        %267 = sbr.rel (%p265) target = $region36
      $region35: #{linear_ae_forward.1} parent=11 // pred_region
        _
      $region36: #{linear_ae_forward.1} parent=11 // pred_fallthru
        _
      // Predicated region
      $region37: #{linear_ae_forward.1} parent=11 // pred_check
        %p268 = pneg %p188
      $region38: #{linear_ae_forward.1} parent=11 // pred_check_branch
        %270 = sbr.rel (%p268) target = $region40
      $region39: #{linear_ae_forward.1} parent=11 // pred_region
        _
      $region40: #{linear_ae_forward.1} parent=11 // pred_fallthru
        _
      // Predicated region
      $region41: #{linear_ae_forward.1} parent=11 // pred_check
        %p271 = pneg %p209
      $region42: #{linear_ae_forward.1} parent=11 // pred_check_branch
        %273 = sbr.rel (%p271) target = $region44
      $region43: #{linear_ae_forward.1} parent=11 // pred_region
        _
      $region44: #{linear_ae_forward.1} parent=11 // pred_fallthru
        _
    $region12: #{linear_ae_forward.1} parent=5 // pred_fallthru
      _
    %p274 = scmp.lt.s32.totalorder %s15, 2
    // Predicated region
    $region45: #{linear_ae_forward.1} parent=5 // pred_check
      %p275 = pneg %p274
    $region46: #{linear_ae_forward.1} parent=5 // pred_check_branch
      %277 = sbr.rel (%p275) target = $region48
    $region47: #{linear_ae_forward.1} parent=5 // pred_region
      // Predicated region
      $region49: #{linear_ae_forward.1} parent=47 // pred_check
        %p278 = pneg %p35
      $region50: #{linear_ae_forward.1} parent=47 // pred_check_branch
        %280 = sbr.rel (%p278) target = $region52
      $region51: #{linear_ae_forward.1} parent=47 // pred_region
        %s281 = smul.u32 16, %s15
        %p282 = scmp.lt.s32.totalorder %s281, 31
        %s283 = scalar_select %p282, %s281, 31
        %s284 = smul.addr %s283, 7
        %s285 = smul.addr %s284, 8
        %s286 = scalar_lea.vmem %s0, %s285
        %s287 = smul.u32 16, %s15
      $region52: #{linear_ae_forward.1} parent=47 // pred_fallthru
        _
    $region48: #{linear_ae_forward.1} parent=5 // pred_fallthru
      _
    %p288 = scmp.le.s32.totalorder 1, %s15
    %p289 = scmp.lt.s32.totalorder %s15, 3
    %p290 = pnand %p288, %p289
    %p291 = pneg %p290
    // Predicated region
    $region53: #{linear_ae_forward.1} parent=5 // pred_check
      _
    $region54: #{linear_ae_forward.1} parent=5 // pred_check_branch
      %293 = sbr.rel (%p290) target = $region56
    $region55: #{linear_ae_forward.1} parent=5 // pred_region
      %s294 = ssub.s32 %s15, 1
      %s295 = smul.u32 16, %s20
      %p296 = scmp.lt.s32.totalorder %s295, 31
      %s297 = scalar_select %p296, %s295, 31
      %s298 = smul.addr %s297, 7
      %s299 = smul.addr %s298, 8
      %s300 = scalar_lea.vmem %s0, %s299
      %p301 = pneg %p41
      %p302 = pneg %p38
      %p303 = pneg %p62
      %p304 = pneg %p59
      %p305 = pneg %p83
      %p306 = pneg %p80
      %p307 = pneg %p104
      %p308 = pneg %p101
      %p309 = pneg %p125
      %p310 = pneg %p122
      %p311 = pneg %p146
      %p312 = pneg %p143
      %p313 = pneg %p167
      %p314 = pneg %p164
      %p315 = pneg %p188
      %p316 = pneg %p185
      %p317 = pneg %p209
      %p318 = pneg %p206
      %p319 = pneg %p235
      %p320 = pneg %p232
      %s321 = smul.u32 16, %s20
      %p322 = scmp.lt.s32.totalorder %s321, 31
      %s323 = scalar_select %p322, %s321, 31
      %s324 = smul.addr %s323, 7
      %s325 = smul.addr %s324, 8
      %s326 = scalar_lea.vmem %s9, %s325
      %s327 = smul.u32 16, %s20
      %p328 = scmp.lt.s32.totalorder %s327, 31
      %s329 = scalar_select %p328, %s327, 31
      %s330 = smul.addr %s329, 7
      %s331 = smul.addr %s330, 8
      %s332 = scalar_lea.vmem %s0, %s331
      %s333 = smul.u32 16, %s20
      %s334 = smul.u32 16, %s20
      %p335 = scmp.lt.s32.totalorder %s334, 31
      %s336 = scalar_select %p335, %s334, 31
      %s337 = smul.addr %s336, 7
      %s338 = smul.addr %s337, 8
      %s339 = scalar_lea.vmem %s9, %s338
      %s340 = smul.u32 16, %s20
      %v342 = vld [vmem:[%s332] sm:$0xff]
      %v343 = vld [vmem:[%s332 + $0x8] sm:$0xff]
      %v344 = vld [vmem:[%s332 + $0x10] sm:$0xff]
      %v345 = vld [vmem:[%s332 + $0x18] sm:$0xff]
      %v346 = vld [vmem:[%s332 + $0x20] sm:$0xff]
      %v347 = vld [vmem:[%s332 + $0x28] sm:$0xff]
      %v348 = vld [vmem:[%s332 + $0x30] sm:$0xff]
      %v349 = vld [vmem:[%s332 + $0x38] sm:$0xff]
      %v350 = vld [vmem:[%s332 + $0x40] sm:$0xff]
      %v351 = vld [vmem:[%s332 + $0x48] sm:$0xff]
      %v352 = vld [vmem:[%s332 + $0x50] sm:$0xff]
      %v353 = vld [vmem:[%s332 + $0x58] sm:$0xff]
      %v354 = vld [vmem:[%s332 + $0x60] sm:$0xff]
      %v355 = vld [vmem:[%s332 + $0x68] sm:$0xff]
      %v356 = vld [vmem:[%s332 + $0x70] sm:$0xff]
      %v357 = vld [vmem:[%s332 + $0x78] sm:$0xff]
      %v358 = vld [vmem:[%s332 + $0x80] sm:$0xff]
      %v359 = vld [vmem:[%s332 + $0x88] sm:$0xff]
      %v360 = vld [vmem:[%s332 + $0x90] sm:$0xff]
      %v361 = vld [vmem:[%s332 + $0x98] sm:$0xff]
      %v362 = vld [vmem:[%s332 + $0xa0] sm:$0xff]
      %v363 = vld [vmem:[%s332 + $0xa8] sm:$0xff]
      %v364 = vld [vmem:[%s332 + $0xb0] sm:$0xff]
      %v365 = vld [vmem:[%s332 + $0xb8] sm:$0xff]
      %v366 = vld [vmem:[%s332 + $0xc0] sm:$0xff]
      %v367 = vld [vmem:[%s332 + $0xc8] sm:$0xff]
      %v368 = vld [vmem:[%s332 + $0xd0] sm:$0xff]
      %v369 = vld [vmem:[%s332 + $0xd8] sm:$0xff]
      %v370 = vld [vmem:[%s332 + $0xe0] sm:$0xff]
      %v371 = vld [vmem:[%s332 + $0xe8] sm:$0xff]
      %v372 = vld [vmem:[%s332 + $0xf0] sm:$0xff]
      %v373 = vld [vmem:[%s332 + $0xf8] sm:$0xff]
      %v374 = vld [vmem:[%s332 + $0x100] sm:$0xff]
      %v375 = vld [vmem:[%s332 + $0x108] sm:$0xff]
      %v376 = vld [vmem:[%s332 + $0x110] sm:$0xff]
      %v377 = vld [vmem:[%s332 + $0x118] sm:$0xff]
      %v378 = vld [vmem:[%s332 + $0x120] sm:$0xff]
      %v379 = vld [vmem:[%s332 + $0x128] sm:$0xff]
      %v380 = vld [vmem:[%s332 + $0x130] sm:$0xff]
      %v381 = vld [vmem:[%s332 + $0x138] sm:$0xff]
      %v382 = vld [vmem:[%s332 + $0x140] sm:$0xff]
      %v383 = vld [vmem:[%s332 + $0x148] sm:$0xff]
      %v384 = vld [vmem:[%s332 + $0x150] sm:$0xff]
      %v385 = vld [vmem:[%s332 + $0x158] sm:$0xff]
      %v386 = vld [vmem:[%s332 + $0x160] sm:$0xff]
      %v387 = vld [vmem:[%s332 + $0x168] sm:$0xff]
      %v388 = vld [vmem:[%s332 + $0x170] sm:$0xff]
      %v389 = vld [vmem:[%s332 + $0x178] sm:$0xff]
      %v390 = vld [vmem:[%s332 + $0x180] sm:$0xff]
      %v391 = vld [vmem:[%s332 + $0x188] sm:$0xff]
      %v392 = vld [vmem:[%s332 + $0x190] sm:$0xff]
      %v393 = vld [vmem:[%s332 + $0x198] sm:$0xff]
      %v394 = vld [vmem:[%s332 + $0x1a0] sm:$0xff]
      %v395 = vld [vmem:[%s332 + $0x1a8] sm:$0xff]
      %v396 = vld [vmem:[%s332 + $0x1b0] sm:$0xff]
      %v397 = vld [vmem:[%s332 + $0x1b8] sm:$0xff]
      %v398 = vld [vmem:[%s332 + $0x1c0] sm:$0xff]
      %v399 = vld [vmem:[%s332 + $0x1c8] sm:$0xff]
      %v400 = vld [vmem:[%s332 + $0x1d0] sm:$0xff]
      %v401 = vld [vmem:[%s332 + $0x1d8] sm:$0xff]
      %v402 = vld [vmem:[%s332 + $0x1e0] sm:$0xff]
      %v403 = vld [vmem:[%s332 + $0x1e8] sm:$0xff]
      %v404 = vld [vmem:[%s332 + $0x1f0] sm:$0xff]
      %v405 = vld [vmem:[%s332 + $0x1f8] sm:$0xff]
      %v406 = vld [vmem:[%s332 + $0x200] sm:$0xff]
      %v407 = vld [vmem:[%s332 + $0x208] sm:$0xff]
      %v408 = vld [vmem:[%s332 + $0x210] sm:$0xff]
      %v409 = vld [vmem:[%s332 + $0x218] sm:$0xff]
      %v410 = vld [vmem:[%s332 + $0x220] sm:$0xff]
      %v411 = vld [vmem:[%s332 + $0x228] sm:$0xff]
      %v412 = vld [vmem:[%s332 + $0x230] sm:$0xff]
      %v413 = vld [vmem:[%s332 + $0x238] sm:$0xff]
      %v414 = vld [vmem:[%s332 + $0x240] sm:$0xff]
      %v415 = vld [vmem:[%s332 + $0x248] sm:$0xff]
      %v416 = vld [vmem:[%s332 + $0x250] sm:$0xff]
      %v417 = vld [vmem:[%s332 + $0x258] sm:$0xff]
      %v418 = vld [vmem:[%s332 + $0x260] sm:$0xff]
      %v419 = vld [vmem:[%s332 + $0x268] sm:$0xff]
      %v420 = vld [vmem:[%s332 + $0x270] sm:$0xff]
      %v421 = vld [vmem:[%s332 + $0x278] sm:$0xff]
      %v422 = vld [vmem:[%s332 + $0x280] sm:$0xff]
      %v423 = vld [vmem:[%s332 + $0x288] sm:$0xff]
      %v424 = vld [vmem:[%s332 + $0x290] sm:$0xff]
      %v425 = vld [vmem:[%s332 + $0x298] sm:$0xff]
      %v426 = vld [vmem:[%s332 + $0x2a0] sm:$0xff]
      %v427 = vld [vmem:[%s332 + $0x2a8] sm:$0xff]
      %v428 = vld [vmem:[%s332 + $0x2b0] sm:$0xff]
      %v429 = vld [vmem:[%s332 + $0x2b8] sm:$0xff]
      %v430 = vld [vmem:[%s332 + $0x2c0] sm:$0xff]
      %v431 = vld [vmem:[%s332 + $0x2c8] sm:$0xff]
      %v432 = vld [vmem:[%s332 + $0x2d0] sm:$0xff]
      %v433 = vld [vmem:[%s332 + $0x2d8] sm:$0xff]
      %v434 = vld [vmem:[%s332 + $0x2e0] sm:$0xff]
      %v435 = vld [vmem:[%s332 + $0x2e8] sm:$0xff]
      %v436 = vld [vmem:[%s332 + $0x2f0] sm:$0xff]
      %v437 = vld [vmem:[%s332 + $0x2f8] sm:$0xff]
      %v438 = vld [vmem:[%s332 + $0x300] sm:$0xff]
      %v439 = vld [vmem:[%s332 + $0x308] sm:$0xff]
      %v440 = vld [vmem:[%s332 + $0x310] sm:$0xff]
      %v441 = vld [vmem:[%s332 + $0x318] sm:$0xff]
      %v442 = vld [vmem:[%s332 + $0x320] sm:$0xff]
      %v443 = vld [vmem:[%s332 + $0x328] sm:$0xff]
      %v444 = vld [vmem:[%s332 + $0x330] sm:$0xff]
      %v445 = vld [vmem:[%s332 + $0x338] sm:$0xff]
      %v446 = vld [vmem:[%s332 + $0x340] sm:$0xff]
      %v447 = vld [vmem:[%s332 + $0x348] sm:$0xff]
      %v448 = vld [vmem:[%s332 + $0x350] sm:$0xff]
      %v449 = vld [vmem:[%s332 + $0x358] sm:$0xff]
      %v450 = vld [vmem:[%s332 + $0x360] sm:$0xff]
      %v451 = vld [vmem:[%s332 + $0x368] sm:$0xff]
      %v452 = vld [vmem:[%s332 + $0x370] sm:$0xff]
      %v453 = vld [vmem:[%s332 + $0x378] sm:$0xff]
      %v454 = vpack.c.bf16 %v349, %v342
      %v455 = vpack.c.bf16 %v350, %v343
      %v456 = vpack.c.bf16 %v351, %v344
      %v457 = vpack.c.bf16 %v352, %v345
      %v458 = vpack.c.bf16 %v353, %v346
      %v459 = vpack.c.bf16 %v354, %v347
      %v460 = vpack.c.bf16 %v355, %v348
      %v461 = vpack.c.bf16 %v363, %v356
      %v462 = vpack.c.bf16 %v364, %v357
      %v463 = vpack.c.bf16 %v365, %v358
      %v464 = vpack.c.bf16 %v366, %v359
      %v465 = vpack.c.bf16 %v367, %v360
      %v466 = vpack.c.bf16 %v368, %v361
      %v467 = vpack.c.bf16 %v369, %v362
      %v468 = vpack.c.bf16 %v377, %v370
      %v469 = vpack.c.bf16 %v378, %v371
      %v470 = vpack.c.bf16 %v379, %v372
      %v471 = vpack.c.bf16 %v380, %v373
      %v472 = vpack.c.bf16 %v381, %v374
      %v473 = vpack.c.bf16 %v382, %v375
      %v474 = vpack.c.bf16 %v383, %v376
      %v475 = vpack.c.bf16 %v391, %v384
      %v476 = vpack.c.bf16 %v392, %v385
      %v477 = vpack.c.bf16 %v393, %v386
      %v478 = vpack.c.bf16 %v394, %v387
      %v479 = vpack.c.bf16 %v395, %v388
      %v480 = vpack.c.bf16 %v396, %v389
      %v481 = vpack.c.bf16 %v397, %v390
      %v482 = vpack.c.bf16 %v405, %v398
      %v483 = vpack.c.bf16 %v406, %v399
      %v484 = vpack.c.bf16 %v407, %v400
      %v485 = vpack.c.bf16 %v408, %v401
      %v486 = vpack.c.bf16 %v409, %v402
      %v487 = vpack.c.bf16 %v410, %v403
      %v488 = vpack.c.bf16 %v411, %v404
      %v489 = vpack.c.bf16 %v419, %v412
      %v490 = vpack.c.bf16 %v420, %v413
      %v491 = vpack.c.bf16 %v421, %v414
      %v492 = vpack.c.bf16 %v422, %v415
      %v493 = vpack.c.bf16 %v423, %v416
      %v494 = vpack.c.bf16 %v424, %v417
      %v495 = vpack.c.bf16 %v425, %v418
      %v496 = vpack.c.bf16 %v433, %v426
      %v497 = vpack.c.bf16 %v434, %v427
      %v498 = vpack.c.bf16 %v435, %v428
      %v499 = vpack.c.bf16 %v436, %v429
      %v500 = vpack.c.bf16 %v437, %v430
      %v501 = vpack.c.bf16 %v438, %v431
      %v502 = vpack.c.bf16 %v439, %v432
      %v503 = vpack.c.bf16 %v447, %v440
      %v504 = vpack.c.bf16 %v448, %v441
      %v505 = vpack.c.bf16 %v449, %v442
      %v506 = vpack.c.bf16 %v450, %v443
      %v507 = vpack.c.bf16 %v451, %v444
      %v508 = vpack.c.bf16 %v452, %v445
      %v509 = vpack.c.bf16 %v453, %v446
      %v510 = vld [vmem:[%s1] sm:$0xf]
      %v511 = vld [vmem:[%s1 + $0x4] sm:$0xf]
      %v512 = vld [vmem:[%s1 + $0x8] sm:$0xf]
      %v513 = vld [vmem:[%s1 + $0xc] sm:$0xf]
      %v514 = vld [vmem:[%s1 + $0x10] sm:$0xf]
      %v515 = vld [vmem:[%s1 + $0x14] sm:$0xf]
      %v516 = vld [vmem:[%s1 + $0x18] sm:$0xf]
      %v517 = vld [vmem:[%s1 + $0x1c] sm:$0xf]
      %v518 = vld [vmem:[%s1 + $0x20] sm:$0xf]
      %v519 = vld [vmem:[%s1 + $0x24] sm:$0xf]
      %v520 = vld [vmem:[%s1 + $0x28] sm:$0xf]
      %v521 = vld [vmem:[%s1 + $0x2c] sm:$0xf]
      %v522 = vld [vmem:[%s1 + $0x30] sm:$0xf]
      %v523 = vld [vmem:[%s1 + $0x34] sm:$0xf]
      %v524 = vld [vmem:[%s1 + $0x38] sm:$0xf]
      %v525 = vld [vmem:[%s1 + $0x3c] sm:$0xf]
      %v526 = vld [vmem:[%s1 + $0x40] sm:$0xf]
      %v527 = vld [vmem:[%s1 + $0x44] sm:$0xf]
      %v528 = vld [vmem:[%s1 + $0x48] sm:$0xf]
      %v529 = vld [vmem:[%s1 + $0x4c] sm:$0xf]
      %v530 = vld [vmem:[%s1 + $0x50] sm:$0xf]
      %v531 = vld [vmem:[%s1 + $0x54] sm:$0xf]
      %v532 = vld [vmem:[%s1 + $0x58] sm:$0xf]
      %v533 = vld [vmem:[%s1 + $0x5c] sm:$0xf]
      %v534 = vld [vmem:[%s1 + $0x60] sm:$0xf]
      %v535 = vld [vmem:[%s1 + $0x64] sm:$0xf]
      %v536 = vld [vmem:[%s1 + $0x68] sm:$0xf]
      %v537 = vld [vmem:[%s1 + $0x6c] sm:$0xf]
      %v538 = vld [vmem:[%s1 + $0x70] sm:$0xf]
      %v539 = vld [vmem:[%s1 + $0x74] sm:$0xf]
      %v540 = vld [vmem:[%s1 + $0x78] sm:$0xf]
      %v541 = vld [vmem:[%s1 + $0x7c] sm:$0xf]
      %v542 = vld [vmem:[%s1 + $0x80] sm:$0xf]
      %v543 = vld [vmem:[%s1 + $0x84] sm:$0xf]
      %v544 = vld [vmem:[%s1 + $0x88] sm:$0xf]
      %v545 = vld [vmem:[%s1 + $0x8c] sm:$0xf]
      %v546 = vld [vmem:[%s1 + $0x90] sm:$0xf]
      %v547 = vld [vmem:[%s1 + $0x94] sm:$0xf]
      %v548 = vld [vmem:[%s1 + $0x98] sm:$0xf]
      %v549 = vld [vmem:[%s1 + $0x9c] sm:$0xf]
      %v550 = vld [vmem:[%s1 + $0xa0] sm:$0xf]
      %v551 = vld [vmem:[%s1 + $0xa4] sm:$0xf]
      %v552 = vld [vmem:[%s1 + $0xa8] sm:$0xf]
      %v553 = vld [vmem:[%s1 + $0xac] sm:$0xf]
      %v554 = vld [vmem:[%s1 + $0xb0] sm:$0xf]
      %v555 = vld [vmem:[%s1 + $0xb4] sm:$0xf]
      %v556 = vld [vmem:[%s1 + $0xb8] sm:$0xf]
      %v557 = vld [vmem:[%s1 + $0xbc] sm:$0xf]
      %v558 = vld [vmem:[%s1 + $0xc0] sm:$0xf]
      %v559 = vld [vmem:[%s1 + $0xc4] sm:$0xf]
      %v560 = vld [vmem:[%s1 + $0xc8] sm:$0xf]
      %v561 = vld [vmem:[%s1 + $0xcc] sm:$0xf]
      %v562 = vld [vmem:[%s1 + $0xd0] sm:$0xf]
      %v563 = vld [vmem:[%s1 + $0xd4] sm:$0xf]
      %v564 = vld [vmem:[%s1 + $0xd8] sm:$0xf]
      %v565 = vld [vmem:[%s1 + $0xdc] sm:$0xf]
      %v566 = vld [vmem:[%s1 + $0xe0] sm:$0xf]
      %v567 = vld [vmem:[%s1 + $0xe4] sm:$0xf]
      %v568 = vld [vmem:[%s1 + $0xe8] sm:$0xf]
      %v569 = vld [vmem:[%s1 + $0xec] sm:$0xf]
      %v570 = vld [vmem:[%s1 + $0xf0] sm:$0xf]
      %v571 = vld [vmem:[%s1 + $0xf4] sm:$0xf]
      %v572 = vld [vmem:[%s1 + $0xf8] sm:$0xf]
      %v573 = vld [vmem:[%s1 + $0xfc] sm:$0xf]
      %v574 = vld [vmem:[%s1 + $0x100] sm:$0xf]
      %v575 = vld [vmem:[%s1 + $0x104] sm:$0xf]
      %v576 = vld [vmem:[%s1 + $0x108] sm:$0xf]
      %v577 = vld [vmem:[%s1 + $0x10c] sm:$0xf]
      %v578 = vld [vmem:[%s1 + $0x110] sm:$0xf]
      %v579 = vld [vmem:[%s1 + $0x114] sm:$0xf]
      %v580 = vld [vmem:[%s1 + $0x118] sm:$0xf]
      %v581 = vld [vmem:[%s1 + $0x11c] sm:$0xf]
      %v582 = vld [vmem:[%s1 + $0x120] sm:$0xf]
      %v583 = vld [vmem:[%s1 + $0x124] sm:$0xf]
      %v584 = vld [vmem:[%s1 + $0x128] sm:$0xf]
      %v585 = vld [vmem:[%s1 + $0x12c] sm:$0xf]
      %v586 = vld [vmem:[%s1 + $0x130] sm:$0xf]
      %v587 = vld [vmem:[%s1 + $0x134] sm:$0xf]
      %v588 = vld [vmem:[%s1 + $0x138] sm:$0xf]
      %v589 = vld [vmem:[%s1 + $0x13c] sm:$0xf]
      %v590 = vld [vmem:[%s1 + $0x140] sm:$0xf]
      %v591 = vld [vmem:[%s1 + $0x144] sm:$0xf]
      %v592 = vld [vmem:[%s1 + $0x148] sm:$0xf]
      %v593 = vld [vmem:[%s1 + $0x14c] sm:$0xf]
      %v594 = vld [vmem:[%s1 + $0x150] sm:$0xf]
      %v595 = vld [vmem:[%s1 + $0x154] sm:$0xf]
      %v596 = vld [vmem:[%s1 + $0x158] sm:$0xf]
      %v597 = vld [vmem:[%s1 + $0x15c] sm:$0xf]
      %v598 = vld [vmem:[%s1 + $0x160] sm:$0xf]
      %v599 = vld [vmem:[%s1 + $0x164] sm:$0xf]
      %v600 = vld [vmem:[%s1 + $0x168] sm:$0xf]
      %v601 = vld [vmem:[%s1 + $0x16c] sm:$0xf]
      %v602 = vld [vmem:[%s1 + $0x170] sm:$0xf]
      %v603 = vld [vmem:[%s1 + $0x174] sm:$0xf]
      %v604 = vld [vmem:[%s1 + $0x178] sm:$0xf]
      %v605 = vld [vmem:[%s1 + $0x17c] sm:$0xf]
      %v606 = vld [vmem:[%s1 + $0x180] sm:$0xf]
      %v607 = vld [vmem:[%s1 + $0x184] sm:$0xf]
      %v608 = vld [vmem:[%s8] ss:$0 sm:$0xff]
      %v707 = vunpack.c.l.b16 %v510
      %v708 = vunpack.c.l.b16 %v511
      %v709 = vunpack.c.l.b16 %v512
      %v710 = vunpack.c.l.b16 %v513
      %v711 = vunpack.c.l.b16 %v514
      %v712 = vunpack.c.l.b16 %v515
      %v713 = vunpack.c.l.b16 %v516
      %v714 = vunpack.c.l.b16 %v517
      %v715 = vunpack.c.l.b16 %v518
      %v716 = vunpack.c.l.b16 %v519
      %v717 = vunpack.c.l.b16 %v520
      %v718 = vunpack.c.l.b16 %v521
      %v719 = vunpack.c.l.b16 %v522
      %v720 = vunpack.c.l.b16 %v523
      %v721 = vunpack.c.l.b16 %v524
      %v722 = vunpack.c.l.b16 %v525
      %v723 = vunpack.c.l.b16 %v526
      %v724 = vunpack.c.l.b16 %v527
      %v725 = vunpack.c.l.b16 %v528
      %v726 = vunpack.c.l.b16 %v529
      %v727 = vunpack.c.l.b16 %v530
      %v728 = vunpack.c.l.b16 %v531
      %v729 = vunpack.c.l.b16 %v532
      %v730 = vunpack.c.l.b16 %v533
      %v731 = vunpack.c.l.b16 %v534
      %v732 = vunpack.c.l.b16 %v535
      %v733 = vunpack.c.l.b16 %v536
      %v734 = vunpack.c.l.b16 %v537
      %v735 = vunpack.c.l.b16 %v538
      %v736 = vunpack.c.l.b16 %v539
      %v737 = vunpack.c.l.b16 %v540
      %v738 = vunpack.c.l.b16 %v541
      %v739 = vunpack.c.l.b16 %v542
      %v740 = vunpack.c.l.b16 %v543
      %v741 = vunpack.c.l.b16 %v544
      %v742 = vunpack.c.l.b16 %v545
      %v743 = vunpack.c.l.b16 %v546
      %v744 = vunpack.c.l.b16 %v547
      %v745 = vunpack.c.l.b16 %v548
      %v746 = vunpack.c.l.b16 %v549
      %v747 = vunpack.c.l.b16 %v550
      %v748 = vunpack.c.l.b16 %v551
      %v749 = vunpack.c.l.b16 %v552
      %v750 = vunpack.c.l.b16 %v553
      %v751 = vunpack.c.l.b16 %v554
      %v752 = vunpack.c.l.b16 %v555
      %v753 = vunpack.c.l.b16 %v556
      %v754 = vunpack.c.l.b16 %v557
      %v755 = vunpack.c.l.b16 %v558
      %v756 = vunpack.c.l.b16 %v559
      %v757 = vunpack.c.l.b16 %v560
      %v758 = vunpack.c.l.b16 %v561
      %v759 = vunpack.c.l.b16 %v562
      %v760 = vunpack.c.l.b16 %v563
      %v761 = vunpack.c.l.b16 %v564
      %v762 = vunpack.c.l.b16 %v565
      %v763 = vunpack.c.l.b16 %v566
      %v764 = vunpack.c.l.b16 %v567
      %v765 = vunpack.c.l.b16 %v568
      %v766 = vunpack.c.l.b16 %v569
      %v767 = vunpack.c.l.b16 %v570
      %v768 = vunpack.c.l.b16 %v571
      %v769 = vunpack.c.l.b16 %v572
      %v770 = vunpack.c.l.b16 %v573
      %v771 = vunpack.c.l.b16 %v574
      %v772 = vunpack.c.l.b16 %v575
      %v773 = vunpack.c.l.b16 %v576
      %v774 = vunpack.c.l.b16 %v577
      %v775 = vunpack.c.l.b16 %v578
      %v776 = vunpack.c.l.b16 %v579
      %v777 = vunpack.c.l.b16 %v580
      %v778 = vunpack.c.l.b16 %v581
      %v779 = vunpack.c.l.b16 %v582
      %v780 = vunpack.c.l.b16 %v583
      %v781 = vunpack.c.l.b16 %v584
      %v782 = vunpack.c.l.b16 %v585
      %v783 = vunpack.c.l.b16 %v586
      %v784 = vunpack.c.l.b16 %v587
      %v785 = vunpack.c.l.b16 %v588
      %v786 = vunpack.c.l.b16 %v589
      %v787 = vunpack.c.l.b16 %v590
      %v788 = vunpack.c.l.b16 %v591
      %v789 = vunpack.c.l.b16 %v592
      %v790 = vunpack.c.l.b16 %v593
      %v791 = vunpack.c.l.b16 %v594
      %v792 = vunpack.c.l.b16 %v595
      %v793 = vunpack.c.l.b16 %v596
      %v794 = vunpack.c.l.b16 %v597
      %v795 = vunpack.c.l.b16 %v598
      %v796 = vunpack.c.l.b16 %v599
      %v797 = vunpack.c.l.b16 %v600
      %v798 = vunpack.c.l.b16 %v601
      %v799 = vunpack.c.l.b16 %v602
      %v800 = vunpack.c.l.b16 %v603
      %v801 = vunpack.c.l.b16 %v604
      %v802 = vunpack.c.l.b16 %v605
      %v803 = vunpack.c.l.b16 %v606
      %v804 = vunpack.c.l.b16 %v607
      %v805 = vpack.c.b16 %v708, %v707
      %v806 = vpack.c.b16 %v710, %v709
      %v807 = vpack.c.b16 %v712, %v711
      %v808 = vpack.c.b16 %v714, %v713
      %v809 = vpack.c.b16 %v716, %v715
      %v810 = vpack.c.b16 %v718, %v717
      %v811 = vpack.c.b16 %v720, %v719
      %v812 = vpack.c.b16 %v722, %v721
      %v813 = vpack.c.b16 %v724, %v723
      %v814 = vpack.c.b16 %v726, %v725
      %v815 = vpack.c.b16 %v728, %v727
      %v816 = vpack.c.b16 %v730, %v729
      %v817 = vpack.c.b16 %v732, %v731
      %v818 = vpack.c.b16 %v734, %v733
      %v819 = vpack.c.b16 %v736, %v735
      %v820 = vpack.c.b16 %v738, %v737
      %v821 = vpack.c.b16 %v740, %v739
      %v822 = vpack.c.b16 %v742, %v741
      %v823 = vpack.c.b16 %v744, %v743
      %v824 = vpack.c.b16 %v746, %v745
      %v825 = vpack.c.b16 %v748, %v747
      %v826 = vpack.c.b16 %v750, %v749
      %v827 = vpack.c.b16 %v752, %v751
      %v828 = vpack.c.b16 %v754, %v753
      %v829 = vpack.c.b16 %v756, %v755
      %v830 = vpack.c.b16 %v758, %v757
      %v831 = vpack.c.b16 %v760, %v759
      %v832 = vpack.c.b16 %v762, %v761
      %v833 = vpack.c.b16 %v764, %v763
      %v834 = vpack.c.b16 %v766, %v765
      %v835 = vpack.c.b16 %v768, %v767
      %v836 = vpack.c.b16 %v770, %v769
      %v837 = vpack.c.b16 %v772, %v771
      %v838 = vpack.c.b16 %v774, %v773
      %v839 = vpack.c.b16 %v776, %v775
      %v840 = vpack.c.b16 %v778, %v777
      %v841 = vpack.c.b16 %v780, %v779
      %v842 = vpack.c.b16 %v782, %v781
      %v843 = vpack.c.b16 %v784, %v783
      %v844 = vpack.c.b16 %v786, %v785
      %v845 = vpack.c.b16 %v788, %v787
      %v846 = vpack.c.b16 %v790, %v789
      %v847 = vpack.c.b16 %v792, %v791
      %v848 = vpack.c.b16 %v794, %v793
      %v849 = vpack.c.b16 %v796, %v795
      %v850 = vpack.c.b16 %v798, %v797
      %v851 = vpack.c.b16 %v800, %v799
      %v852 = vpack.c.b16 %v802, %v801
      %v853 = vpack.c.b16 %v804, %v803
      %vm903 = vcmask 130048
      %v905 = vsel %vm903, %v460, 0
      %v908 = vsel %vm903, %v467, 0
      %v911 = vsel %vm903, %v474, 0
      %v914 = vsel %vm903, %v481, 0
      %v917 = vsel %vm903, %v488, 0
      %v920 = vsel %vm903, %v495, 0
      %v923 = vsel %vm903, %v502, 0
      %v926 = vsel %vm903, %v509, 0
      %928 = vmatprep.subr.bf16.mxu0 0
      %929 = vmatpush1.bf16.msra.mxu0 %v812
      %930 = vmatprep.subr.bf16.mxu0 0
      %931 = vmatpush1.bf16.msra.mxu0 %v811
      %932 = vmatprep.subr.bf16.mxu0 0
      %933 = vmatpush1.bf16.msra.mxu0 %v810
      %934 = vmatprep.subr.bf16.mxu0 0
      %935 = vmatpush1.bf16.msra.mxu0 %v809
      %936 = vmatprep.subr.bf16.mxu0 0
      %937 = vmatpush1.bf16.msra.mxu0 %v808
      %938 = vmatprep.subr.bf16.mxu0 0
      %939 = vmatpush1.bf16.msra.mxu0 %v807
      %940 = vmatprep.subr.bf16.mxu0 0
      %941 = vmatpush1.bf16.msra.mxu0 %v806
      %942 = vmatprep.subr.bf16.mxu0 0
      %943 = vmatpush1.bf16.msra.mxu0 %v805
      %944 = vmatprep.subr.bf16.mxu0 0
      %945 = vmatpush2.bf16.msra.mxu0 %v820
      %946 = vmatprep.subr.bf16.mxu0 0
      %947 = vmatpush2.bf16.msra.mxu0 %v819
      %948 = vmatprep.subr.bf16.mxu0 0
      %949 = vmatpush2.bf16.msra.mxu0 %v818
      %950 = vmatprep.subr.bf16.mxu0 0
      %951 = vmatpush2.bf16.msra.mxu0 %v817
      %952 = vmatprep.subr.bf16.mxu0 0
      %953 = vmatpush2.bf16.msra.mxu0 %v816
      %954 = vmatprep.subr.bf16.mxu0 0
      %955 = vmatpush2.bf16.msra.mxu0 %v815
      %956 = vmatprep.subr.bf16.mxu0 0
      %957 = vmatpush2.bf16.msra.mxu0 %v814
      %958 = vmatprep.subr.bf16.mxu0 0
      %959 = vmatpush2.bf16.msra.mxu0 %v813
      %960 = vmatprep.mubr.bf16.mxu0 %v455
      %961 = vmatmul.mubr.bf16.gmra.mxu0 %v454
      %v962 = vpop.f32.mrf.mxu0
      %v963 = vadd.f32 %v608, %v962
      %v964 = vpop.f32.mrf.mxu0
      %v965 = vpop.f32.mrf.mxu0
      %v966 = vadd.f32 %v608, %v965
      %v967 = vpop.f32.mrf.mxu0
      %968 = vmatprep.mubr.bf16.mxu0 %v462
      %969 = vmatmul.mubr.bf16.gmra.mxu0 %v461
      %v970 = vpop.f32.mrf.mxu0
      %v971 = vadd.f32 %v608, %v970
      %v972 = vpop.f32.mrf.mxu0
      %v973 = vpop.f32.mrf.mxu0
      %v974 = vadd.f32 %v608, %v973
      %v975 = vpop.f32.mrf.mxu0
      %976 = vmatprep.mubr.bf16.mxu0 %v469
      %977 = vmatmul.mubr.bf16.gmra.mxu0 %v468
      %v978 = vpop.f32.mrf.mxu0
      %v979 = vadd.f32 %v608, %v978
      %v980 = vpop.f32.mrf.mxu0
      %v981 = vpop.f32.mrf.mxu0
      %v982 = vadd.f32 %v608, %v981
      %v983 = vpop.f32.mrf.mxu0
      %984 = vmatprep.mubr.bf16.mxu0 %v476
      %985 = vmatmul.mubr.bf16.gmra.mxu0 %v475
      %v986 = vpop.f32.mrf.mxu0
      %v987 = vadd.f32 %v608, %v986
      %v988 = vpop.f32.mrf.mxu0
      %v989 = vpop.f32.mrf.mxu0
      %v990 = vadd.f32 %v608, %v989
      %v991 = vpop.f32.mrf.mxu0
      %992 = vmatprep.mubr.bf16.mxu0 %v483
      %993 = vmatmul.mubr.bf16.gmra.mxu0 %v482
      %v994 = vpop.f32.mrf.mxu0
      %v995 = vadd.f32 %v608, %v994
      %v996 = vpop.f32.mrf.mxu0
      %v997 = vpop.f32.mrf.mxu0
      %v998 = vadd.f32 %v608, %v997
      %v999 = vpop.f32.mrf.mxu0
      %1000 = vmatprep.mubr.bf16.mxu0 %v490
      %1001 = vmatmul.mubr.bf16.gmra.mxu0 %v489
      %v1002 = vpop.f32.mrf.mxu0
      %v1003 = vadd.f32 %v608, %v1002
      %v1004 = vpop.f32.mrf.mxu0
      %v1005 = vpop.f32.mrf.mxu0
      %v1006 = vadd.f32 %v608, %v1005
      %v1007 = vpop.f32.mrf.mxu0
      %1008 = vmatprep.mubr.bf16.mxu0 %v497
      %1009 = vmatmul.mubr.bf16.gmra.mxu0 %v496
      %v1010 = vpop.f32.mrf.mxu0
      %v1011 = vadd.f32 %v608, %v1010
      %v1012 = vpop.f32.mrf.mxu0
      %v1013 = vpop.f32.mrf.mxu0
      %v1014 = vadd.f32 %v608, %v1013
      %v1015 = vpop.f32.mrf.mxu0
      %1016 = vmatprep.mubr.bf16.mxu0 %v504
      %1017 = vmatmul.mubr.bf16.gmra.mxu0 %v503
      %v1018 = vpop.f32.mrf.mxu0
      %v1019 = vadd.f32 %v608, %v1018
      %v1020 = vpop.f32.mrf.mxu0
      %v1021 = vpop.f32.mrf.mxu0
      %v1022 = vadd.f32 %v608, %v1021
      %v1023 = vpop.f32.mrf.mxu0
      %1024 = vdwg.mxu0
      %1025 = vmatprep.subr.bf16.mxu0 0
      %1026 = vmatpush1.bf16.msra.mxu0 %v828
      %1027 = vmatprep.subr.bf16.mxu0 0
      %1028 = vmatpush1.bf16.msra.mxu0 %v827
      %1029 = vmatprep.subr.bf16.mxu0 0
      %1030 = vmatpush1.bf16.msra.mxu0 %v826
      %1031 = vmatprep.subr.bf16.mxu0 0
      %1032 = vmatpush1.bf16.msra.mxu0 %v825
      %1033 = vmatprep.subr.bf16.mxu0 0
      %1034 = vmatpush1.bf16.msra.mxu0 %v824
      %1035 = vmatprep.subr.bf16.mxu0 0
      %1036 = vmatpush1.bf16.msra.mxu0 %v823
      %1037 = vmatprep.subr.bf16.mxu0 0
      %1038 = vmatpush1.bf16.msra.mxu0 %v822
      %1039 = vmatprep.subr.bf16.mxu0 0
      %1040 = vmatpush1.bf16.msra.mxu0 %v821
      %1041 = vmatprep.subr.bf16.mxu0 0
      %1042 = vmatpush2.bf16.msra.mxu0 %v836
      %1043 = vmatprep.subr.bf16.mxu0 0
      %1044 = vmatpush2.bf16.msra.mxu0 %v835
      %1045 = vmatprep.subr.bf16.mxu0 0
      %1046 = vmatpush2.bf16.msra.mxu0 %v834
      %1047 = vmatprep.subr.bf16.mxu0 0
      %1048 = vmatpush2.bf16.msra.mxu0 %v833
      %1049 = vmatprep.subr.bf16.mxu0 0
      %1050 = vmatpush2.bf16.msra.mxu0 %v832
      %1051 = vmatprep.subr.bf16.mxu0 0
      %1052 = vmatpush2.bf16.msra.mxu0 %v831
      %1053 = vmatprep.subr.bf16.mxu0 0
      %1054 = vmatpush2.bf16.msra.mxu0 %v830
      %1055 = vmatprep.subr.bf16.mxu0 0
      %1056 = vmatpush2.bf16.msra.mxu0 %v829
      %1057 = vmatprep.mubr.bf16.mxu0 %v457
      %1058 = vmatmul.mubr.bf16.gmra.mxu0 %v456
      %v1059 = vpop.f32.mrf.mxu0
      %v1060 = vadd.f32 %v963, %v1059
      %v1061 = vpop.f32.mrf.mxu0
      %v1062 = vpop.f32.mrf.mxu0
      %v1063 = vadd.f32 %v966, %v1062
      %v1064 = vpop.f32.mrf.mxu0
      %1065 = vmatprep.mubr.bf16.mxu0 %v464
      %1066 = vmatmul.mubr.bf16.gmra.mxu0 %v463
      %v1067 = vpop.f32.mrf.mxu0
      %v1068 = vadd.f32 %v971, %v1067
      %v1069 = vpop.f32.mrf.mxu0
      %v1070 = vpop.f32.mrf.mxu0
      %v1071 = vadd.f32 %v974, %v1070
      %v1072 = vpop.f32.mrf.mxu0
      %1073 = vmatprep.mubr.bf16.mxu0 %v471
      %1074 = vmatmul.mubr.bf16.gmra.mxu0 %v470
      %v1075 = vpop.f32.mrf.mxu0
      %v1076 = vadd.f32 %v979, %v1075
      %v1077 = vpop.f32.mrf.mxu0
      %v1078 = vpop.f32.mrf.mxu0
      %v1079 = vadd.f32 %v982, %v1078
      %v1080 = vpop.f32.mrf.mxu0
      %1081 = vmatprep.mubr.bf16.mxu0 %v478
      %1082 = vmatmul.mubr.bf16.gmra.mxu0 %v477
      %v1083 = vpop.f32.mrf.mxu0
      %v1084 = vadd.f32 %v987, %v1083
      %v1085 = vpop.f32.mrf.mxu0
      %v1086 = vpop.f32.mrf.mxu0
      %v1087 = vadd.f32 %v990, %v1086
      %v1088 = vpop.f32.mrf.mxu0
      %1089 = vmatprep.mubr.bf16.mxu0 %v485
      %1090 = vmatmul.mubr.bf16.gmra.mxu0 %v484
      %v1091 = vpop.f32.mrf.mxu0
      %v1092 = vadd.f32 %v995, %v1091
      %v1093 = vpop.f32.mrf.mxu0
      %v1094 = vpop.f32.mrf.mxu0
      %v1095 = vadd.f32 %v998, %v1094
      %v1096 = vpop.f32.mrf.mxu0
      %1097 = vmatprep.mubr.bf16.mxu0 %v492
      %1098 = vmatmul.mubr.bf16.gmra.mxu0 %v491
      %v1099 = vpop.f32.mrf.mxu0
      %v1100 = vadd.f32 %v1003, %v1099
      %v1101 = vpop.f32.mrf.mxu0
      %v1102 = vpop.f32.mrf.mxu0
      %v1103 = vadd.f32 %v1006, %v1102
      %v1104 = vpop.f32.mrf.mxu0
      %1105 = vmatprep.mubr.bf16.mxu0 %v499
      %1106 = vmatmul.mubr.bf16.gmra.mxu0 %v498
      %v1107 = vpop.f32.mrf.mxu0
      %v1108 = vadd.f32 %v1011, %v1107
      %v1109 = vpop.f32.mrf.mxu0
      %v1110 = vpop.f32.mrf.mxu0
      %v1111 = vadd.f32 %v1014, %v1110
      %v1112 = vpop.f32.mrf.mxu0
      %1113 = vmatprep.mubr.bf16.mxu0 %v506
      %1114 = vmatmul.mubr.bf16.gmra.mxu0 %v505
      %v1115 = vpop.f32.mrf.mxu0
      %v1116 = vadd.f32 %v1019, %v1115
      %v1117 = vpop.f32.mrf.mxu0
      %v1118 = vpop.f32.mrf.mxu0
      %v1119 = vadd.f32 %v1022, %v1118
      %v1120 = vpop.f32.mrf.mxu0
      %1121 = vdwg.mxu0
      %1122 = vmatprep.subr.bf16.mxu0 0
      %1123 = vmatpush1.bf16.msra.mxu0 %v844
      %1124 = vmatprep.subr.bf16.mxu0 0
      %1125 = vmatpush1.bf16.msra.mxu0 %v843
      %1126 = vmatprep.subr.bf16.mxu0 0
      %1127 = vmatpush1.bf16.msra.mxu0 %v842
      %1128 = vmatprep.subr.bf16.mxu0 0
      %1129 = vmatpush1.bf16.msra.mxu0 %v841
      %1130 = vmatprep.subr.bf16.mxu0 0
      %1131 = vmatpush1.bf16.msra.mxu0 %v840
      %1132 = vmatprep.subr.bf16.mxu0 0
      %1133 = vmatpush1.bf16.msra.mxu0 %v839
      %1134 = vmatprep.subr.bf16.mxu0 0
      %1135 = vmatpush1.bf16.msra.mxu0 %v838
      %1136 = vmatprep.subr.bf16.mxu0 0
      %1137 = vmatpush1.bf16.msra.mxu0 %v837
      %1138 = vmatprep.subr.bf16.mxu0 0
      %1139 = vmatpush2.bf16.msra.mxu0 %v852
      %1140 = vmatprep.subr.bf16.mxu0 0
      %1141 = vmatpush2.bf16.msra.mxu0 %v851
      %1142 = vmatprep.subr.bf16.mxu0 0
      %1143 = vmatpush2.bf16.msra.mxu0 %v850
      %1144 = vmatprep.subr.bf16.mxu0 0
      %1145 = vmatpush2.bf16.msra.mxu0 %v849
      %1146 = vmatprep.subr.bf16.mxu0 0
      %1147 = vmatpush2.bf16.msra.mxu0 %v848
      %1148 = vmatprep.subr.bf16.mxu0 0
      %1149 = vmatpush2.bf16.msra.mxu0 %v847
      %1150 = vmatprep.subr.bf16.mxu0 0
      %1151 = vmatpush2.bf16.msra.mxu0 %v846
      %1152 = vmatprep.subr.bf16.mxu0 0
      %1153 = vmatpush2.bf16.msra.mxu0 %v845
      %1154 = vmatprep.mubr.bf16.mxu0 %v459
      %1155 = vmatmul.mubr.bf16.gmra.mxu0 %v458
      %v1156 = vpop.f32.mrf.mxu0
      %v1157 = vadd.f32 %v1060, %v1156
      %v1158 = vpop.f32.mrf.mxu0
      %v1159 = vpop.f32.mrf.mxu0
      %v1160 = vadd.f32 %v1063, %v1159
      %v1161 = vpop.f32.mrf.mxu0
      %1162 = vmatprep.mubr.bf16.mxu0 %v466
      %1163 = vmatmul.mubr.bf16.gmra.mxu0 %v465
      %v1164 = vpop.f32.mrf.mxu0
      %v1165 = vadd.f32 %v1068, %v1164
      %v1166 = vpop.f32.mrf.mxu0
      %v1167 = vpop.f32.mrf.mxu0
      %v1168 = vadd.f32 %v1071, %v1167
      %v1169 = vpop.f32.mrf.mxu0
      %1170 = vmatprep.mubr.bf16.mxu0 %v473
      %1171 = vmatmul.mubr.bf16.gmra.mxu0 %v472
      %v1172 = vpop.f32.mrf.mxu0
      %v1173 = vadd.f32 %v1076, %v1172
      %v1174 = vpop.f32.mrf.mxu0
      %v1175 = vpop.f32.mrf.mxu0
      %v1176 = vadd.f32 %v1079, %v1175
      %v1177 = vpop.f32.mrf.mxu0
      %1178 = vmatprep.mubr.bf16.mxu0 %v480
      %1179 = vmatmul.mubr.bf16.gmra.mxu0 %v479
      %v1180 = vpop.f32.mrf.mxu0
      %v1181 = vadd.f32 %v1084, %v1180
      %v1182 = vpop.f32.mrf.mxu0
      %v1183 = vpop.f32.mrf.mxu0
      %v1184 = vadd.f32 %v1087, %v1183
      %v1185 = vpop.f32.mrf.mxu0
      %1186 = vmatprep.mubr.bf16.mxu0 %v487
      %1187 = vmatmul.mubr.bf16.gmra.mxu0 %v486
      %v1188 = vpop.f32.mrf.mxu0
      %v1189 = vadd.f32 %v1092, %v1188
      %v1190 = vpop.f32.mrf.mxu0
      %v1191 = vpop.f32.mrf.mxu0
      %v1192 = vadd.f32 %v1095, %v1191
      %v1193 = vpop.f32.mrf.mxu0
      %1194 = vmatprep.mubr.bf16.mxu0 %v494
      %1195 = vmatmul.mubr.bf16.gmra.mxu0 %v493
      %v1196 = vpop.f32.mrf.mxu0
      %v1197 = vadd.f32 %v1100, %v1196
      %v1198 = vpop.f32.mrf.mxu0
      %v1199 = vpop.f32.mrf.mxu0
      %v1200 = vadd.f32 %v1103, %v1199
      %v1201 = vpop.f32.mrf.mxu0
      %1202 = vmatprep.mubr.bf16.mxu0 %v501
      %1203 = vmatmul.mubr.bf16.gmra.mxu0 %v500
      %v1204 = vpop.f32.mrf.mxu0
      %v1205 = vadd.f32 %v1108, %v1204
      %v1206 = vpop.f32.mrf.mxu0
      %v1207 = vpop.f32.mrf.mxu0
      %v1208 = vadd.f32 %v1111, %v1207
      %v1209 = vpop.f32.mrf.mxu0
      %1210 = vmatprep.mubr.bf16.mxu0 %v508
      %1211 = vmatmul.mubr.bf16.gmra.mxu0 %v507
      %v1212 = vpop.f32.mrf.mxu0
      %v1213 = vadd.f32 %v1116, %v1212
      %v1214 = vpop.f32.mrf.mxu0
      %v1215 = vpop.f32.mrf.mxu0
      %v1216 = vadd.f32 %v1119, %v1215
      %v1217 = vpop.f32.mrf.mxu0
      %1218 = vdwg.mxu0
      %1219 = vmatprep.subr.bf16.mxu0 0
      %1220 = vmatpush1.bf16.msra.mxu0 0
      %1221 = vmatprep.subr.bf16.mxu0 0
      %1222 = vmatpush1.bf16.msra.mxu0 0
      %1223 = vmatprep.subr.bf16.mxu0 0
      %1224 = vmatpush1.bf16.msra.mxu0 0
      %1225 = vmatprep.subr.bf16.mxu0 0
      %1226 = vmatpush1.bf16.msra.mxu0 0
      %1227 = vmatprep.subr.bf16.mxu0 0
      %1228 = vmatpush1.bf16.msra.mxu0 0
      %1229 = vmatprep.subr.bf16.mxu0 0
      %1230 = vmatpush1.bf16.msra.mxu0 0
      %1231 = vmatprep.subr.bf16.mxu0 0
      %1232 = vmatpush1.bf16.msra.mxu0 0
      %1233 = vmatprep.subr.bf16.mxu0 0
      %1234 = vmatpush1.bf16.msra.mxu0 %v853
      %1235 = vmatprep.subr.bf16.mxu0 0
      %1236 = vmatpush2.bf16.msra.mxu0 0
      %1237 = vmatprep.subr.bf16.mxu0 0
      %1238 = vmatpush2.bf16.msra.mxu0 0
      %1239 = vmatprep.subr.bf16.mxu0 0
      %1240 = vmatpush2.bf16.msra.mxu0 0
      %1241 = vmatprep.subr.bf16.mxu0 0
      %1242 = vmatpush2.bf16.msra.mxu0 0
      %1243 = vmatprep.subr.bf16.mxu0 0
      %1244 = vmatpush2.bf16.msra.mxu0 0
      %1245 = vmatprep.subr.bf16.mxu0 0
      %1246 = vmatpush2.bf16.msra.mxu0 0
      %1247 = vmatprep.subr.bf16.mxu0 0
      %1248 = vmatpush2.bf16.msra.mxu0 0
      %1249 = vmatprep.subr.bf16.mxu0 0
      %1250 = vmatpush2.bf16.msra.mxu0 0
      %1251 = vmatprep.mubr.bf16.mxu0 0
      %1252 = vmatmul.mubr.bf16.gmra.mxu0 %v905
      %v1253 = vpop.f32.mrf.mxu0
      %v1254 = vadd.f32 %v1157, %v1253
      %v1255 = vpop.f32.mrf.mxu0
      %v1256 = vpop.f32.mrf.mxu0
      %v1257 = vadd.f32 %v1160, %v1256
      %v1258 = vpop.f32.mrf.mxu0
      %1259 = vmatprep.mubr.bf16.mxu0 0
      %1260 = vmatmul.mubr.bf16.gmra.mxu0 %v908
      %v1261 = vpop.f32.mrf.mxu0
      %v1262 = vadd.f32 %v1165, %v1261
      %v1263 = vpop.f32.mrf.mxu0
      %v1264 = vpop.f32.mrf.mxu0
      %v1265 = vadd.f32 %v1168, %v1264
      %v1266 = vpop.f32.mrf.mxu0
      %1267 = vmatprep.mubr.bf16.mxu0 0
      %1268 = vmatmul.mubr.bf16.gmra.mxu0 %v911
      %v1269 = vpop.f32.mrf.mxu0
      %v1270 = vadd.f32 %v1173, %v1269
      %v1271 = vpop.f32.mrf.mxu0
      %v1272 = vpop.f32.mrf.mxu0
      %v1273 = vadd.f32 %v1176, %v1272
      %v1274 = vpop.f32.mrf.mxu0
      %1275 = vmatprep.mubr.bf16.mxu0 0
      %1276 = vmatmul.mubr.bf16.gmra.mxu0 %v914
      %v1277 = vpop.f32.mrf.mxu0
      %v1278 = vadd.f32 %v1181, %v1277
      %v1279 = vpop.f32.mrf.mxu0
      %v1280 = vpop.f32.mrf.mxu0
      %v1281 = vadd.f32 %v1184, %v1280
      %v1282 = vpop.f32.mrf.mxu0
      %1283 = vmatprep.mubr.bf16.mxu0 0
      %1284 = vmatmul.mubr.bf16.gmra.mxu0 %v917
      %v1285 = vpop.f32.mrf.mxu0
      %v1286 = vadd.f32 %v1189, %v1285
      %v1287 = vpop.f32.mrf.mxu0
      %v1288 = vpop.f32.mrf.mxu0
      %v1289 = vadd.f32 %v1192, %v1288
      %v1290 = vpop.f32.mrf.mxu0
      %1291 = vmatprep.mubr.bf16.mxu0 0
      %1292 = vmatmul.mubr.bf16.gmra.mxu0 %v920
      %v1293 = vpop.f32.mrf.mxu0
      %v1294 = vadd.f32 %v1197, %v1293
      %v1295 = vpop.f32.mrf.mxu0
      %v1296 = vpop.f32.mrf.mxu0
      %v1297 = vadd.f32 %v1200, %v1296
      %v1298 = vpop.f32.mrf.mxu0
      %1299 = vmatprep.mubr.bf16.mxu0 0
      %1300 = vmatmul.mubr.bf16.gmra.mxu0 %v923
      %v1301 = vpop.f32.mrf.mxu0
      %v1302 = vadd.f32 %v1205, %v1301
      %v1303 = vpop.f32.mrf.mxu0
      %v1304 = vpop.f32.mrf.mxu0
      %v1305 = vadd.f32 %v1208, %v1304
      %v1306 = vpop.f32.mrf.mxu0
      %1307 = vmatprep.mubr.bf16.mxu0 0
      %1308 = vmatmul.mubr.bf16.gmra.mxu0 %v926
      %v1309 = vpop.f32.mrf.mxu0
      %v1310 = vadd.f32 %v1213, %v1309
      %v1311 = vpop.f32.mrf.mxu0
      %v1312 = vpop.f32.mrf.mxu0
      %v1313 = vadd.f32 %v1216, %v1312
      %v1314 = vpop.f32.mrf.mxu0
      %1315 = vdwg.mxu0
      %v1316 = vmax.f32 %v1254, 0.0
      %v1317 = vmax.f32 %v1257, 0.0
      %v1318 = vmax.f32 %v1262, 0.0
      %v1319 = vmax.f32 %v1265, 0.0
      %v1320 = vmax.f32 %v1270, 0.0
      %v1321 = vmax.f32 %v1273, 0.0
      %v1322 = vmax.f32 %v1278, 0.0
      %v1323 = vmax.f32 %v1281, 0.0
      %v1324 = vmax.f32 %v1286, 0.0
      %v1325 = vmax.f32 %v1289, 0.0
      %v1326 = vmax.f32 %v1294, 0.0
      %v1327 = vmax.f32 %v1297, 0.0
      %v1328 = vmax.f32 %v1302, 0.0
      %v1329 = vmax.f32 %v1305, 0.0
      %v1330 = vmax.f32 %v1310, 0.0
      %v1331 = vmax.f32 %v1313, 0.0
      %v1332 = vpack.c.bf16 %v1317, %v1316
      %v1333 = vpack.c.bf16 %v1319, %v1318
      %v1334 = vpack.c.bf16 %v1321, %v1320
      %v1335 = vpack.c.bf16 %v1323, %v1322
      %v1336 = vpack.c.bf16 %v1325, %v1324
      %v1337 = vpack.c.bf16 %v1327, %v1326
      %v1338 = vpack.c.bf16 %v1329, %v1328
      %v1339 = vpack.c.bf16 %v1331, %v1330
      %v1340 = vld [vmem:[%s2] sm:$0xf]
      %v1341 = vld [vmem:[%s2 + $0x4] sm:$0xf]
      %v1342 = vld [vmem:[%s2 + $0x8] sm:$0xf]
      %v1343 = vld [vmem:[%s2 + $0xc] sm:$0xf]
      %v1344 = vld [vmem:[%s2 + $0x10] sm:$0xf]
      %v1345 = vld [vmem:[%s2 + $0x14] sm:$0xf]
      %v1346 = vld [vmem:[%s2 + $0x18] sm:$0xf]
      %v1347 = vld [vmem:[%s2 + $0x1c] sm:$0xf]
      %v1348 = vld [vmem:[%s2 + $0x20] sm:$0xf]
      %v1349 = vld [vmem:[%s2 + $0x24] sm:$0xf]
      %v1350 = vld [vmem:[%s2 + $0x28] sm:$0xf]
      %v1351 = vld [vmem:[%s2 + $0x2c] sm:$0xf]
      %v1352 = vld [vmem:[%s2 + $0x30] sm:$0xf]
      %v1353 = vld [vmem:[%s2 + $0x34] sm:$0xf]
      %v1354 = vld [vmem:[%s2 + $0x38] sm:$0xf]
      %v1355 = vld [vmem:[%s2 + $0x3c] sm:$0xf]
      %v1356 = vld [vmem:[%s8 + $0x1] ss:$0 sm:$0xff]
      %v1373 = vunpack.c.l.b16 %v1340
      %v1374 = vunpack.c.l.b16 %v1341
      %v1375 = vunpack.c.l.b16 %v1342
      %v1376 = vunpack.c.l.b16 %v1343
      %v1377 = vunpack.c.l.b16 %v1344
      %v1378 = vunpack.c.l.b16 %v1345
      %v1379 = vunpack.c.l.b16 %v1346
      %v1380 = vunpack.c.l.b16 %v1347
      %v1381 = vunpack.c.l.b16 %v1348
      %v1382 = vunpack.c.l.b16 %v1349
      %v1383 = vunpack.c.l.b16 %v1350
      %v1384 = vunpack.c.l.b16 %v1351
      %v1385 = vunpack.c.l.b16 %v1352
      %v1386 = vunpack.c.l.b16 %v1353
      %v1387 = vunpack.c.l.b16 %v1354
      %v1388 = vunpack.c.l.b16 %v1355
      %v1389 = vpack.c.b16 %v1374, %v1373
      %v1390 = vpack.c.b16 %v1376, %v1375
      %v1391 = vpack.c.b16 %v1378, %v1377
      %v1392 = vpack.c.b16 %v1380, %v1379
      %v1393 = vpack.c.b16 %v1382, %v1381
      %v1394 = vpack.c.b16 %v1384, %v1383
      %v1395 = vpack.c.b16 %v1386, %v1385
      %v1396 = vpack.c.b16 %v1388, %v1387
      %1405 = vmatprep.subr.bf16.mxu0 0
      %1406 = vmatpush1.bf16.msra.mxu0 %v1396
      %1407 = vmatprep.subr.bf16.mxu0 0
      %1408 = vmatpush1.bf16.msra.mxu0 %v1395
      %1409 = vmatprep.subr.bf16.mxu0 0
      %1410 = vmatpush1.bf16.msra.mxu0 %v1394
      %1411 = vmatprep.subr.bf16.mxu0 0
      %1412 = vmatpush1.bf16.msra.mxu0 %v1393
      %1413 = vmatprep.subr.bf16.mxu0 0
      %1414 = vmatpush1.bf16.msra.mxu0 %v1392
      %1415 = vmatprep.subr.bf16.mxu0 0
      %1416 = vmatpush1.bf16.msra.mxu0 %v1391
      %1417 = vmatprep.subr.bf16.mxu0 0
      %1418 = vmatpush1.bf16.msra.mxu0 %v1390
      %1419 = vmatprep.subr.bf16.mxu0 0
      %1420 = vmatpush1.bf16.msra.mxu0 %v1389
      %1421 = vmatprep.subr.bf16.mxu0 0
      %1422 = vmatpush2.bf16.msra.mxu0 0
      %1423 = vmatprep.subr.bf16.mxu0 0
      %1424 = vmatpush2.bf16.msra.mxu0 0
      %1425 = vmatprep.subr.bf16.mxu0 0
      %1426 = vmatpush2.bf16.msra.mxu0 0
      %1427 = vmatprep.subr.bf16.mxu0 0
      %1428 = vmatpush2.bf16.msra.mxu0 0
      %1429 = vmatprep.subr.bf16.mxu0 0
      %1430 = vmatpush2.bf16.msra.mxu0 0
      %1431 = vmatprep.subr.bf16.mxu0 0
      %1432 = vmatpush2.bf16.msra.mxu0 0
      %1433 = vmatprep.subr.bf16.mxu0 0
      %1434 = vmatpush2.bf16.msra.mxu0 0
      %1435 = vmatprep.subr.bf16.mxu0 0
      %1436 = vmatpush2.bf16.msra.mxu0 0
      %1437 = vmatprep.mubr.bf16.mxu0 0
      %1438 = vmatmul.mubr.bf16.gmra.mxu0 %v1332
      %v1439 = vpop.f32.mrf.mxu0
      %v1440 = vadd.f32 %v1356, %v1439
      %v1441 = vpop.f32.mrf.mxu0
      %v1442 = vpop.f32.mrf.mxu0
      %v1443 = vadd.f32 %v1356, %v1442
      %v1444 = vpop.f32.mrf.mxu0
      %1445 = vmatprep.mubr.bf16.mxu0 0
      %1446 = vmatmul.mubr.bf16.gmra.mxu0 %v1333
      %v1447 = vpop.f32.mrf.mxu0
      %v1448 = vadd.f32 %v1356, %v1447
      %v1449 = vpop.f32.mrf.mxu0
      %v1450 = vpop.f32.mrf.mxu0
      %v1451 = vadd.f32 %v1356, %v1450
      %v1452 = vpop.f32.mrf.mxu0
      %1453 = vmatprep.mubr.bf16.mxu0 0
      %1454 = vmatmul.mubr.bf16.gmra.mxu0 %v1334
      %v1455 = vpop.f32.mrf.mxu0
      %v1456 = vadd.f32 %v1356, %v1455
      %v1457 = vpop.f32.mrf.mxu0
      %v1458 = vpop.f32.mrf.mxu0
      %v1459 = vadd.f32 %v1356, %v1458
      %v1460 = vpop.f32.mrf.mxu0
      %1461 = vmatprep.mubr.bf16.mxu0 0
      %1462 = vmatmul.mubr.bf16.gmra.mxu0 %v1335
      %v1463 = vpop.f32.mrf.mxu0
      %v1464 = vadd.f32 %v1356, %v1463
      %v1465 = vpop.f32.mrf.mxu0
      %v1466 = vpop.f32.mrf.mxu0
      %v1467 = vadd.f32 %v1356, %v1466
      %v1468 = vpop.f32.mrf.mxu0
      %1469 = vmatprep.mubr.bf16.mxu0 0
      %1470 = vmatmul.mubr.bf16.gmra.mxu0 %v1336
      %v1471 = vpop.f32.mrf.mxu0
      %v1472 = vadd.f32 %v1356, %v1471
      %v1473 = vpop.f32.mrf.mxu0
      %v1474 = vpop.f32.mrf.mxu0
      %v1475 = vadd.f32 %v1356, %v1474
      %v1476 = vpop.f32.mrf.mxu0
      %1477 = vmatprep.mubr.bf16.mxu0 0
      %1478 = vmatmul.mubr.bf16.gmra.mxu0 %v1337
      %v1479 = vpop.f32.mrf.mxu0
      %v1480 = vadd.f32 %v1356, %v1479
      %v1481 = vpop.f32.mrf.mxu0
      %v1482 = vpop.f32.mrf.mxu0
      %v1483 = vadd.f32 %v1356, %v1482
      %v1484 = vpop.f32.mrf.mxu0
      %1485 = vmatprep.mubr.bf16.mxu0 0
      %1486 = vmatmul.mubr.bf16.gmra.mxu0 %v1338
      %v1487 = vpop.f32.mrf.mxu0
      %v1488 = vadd.f32 %v1356, %v1487
      %v1489 = vpop.f32.mrf.mxu0
      %v1490 = vpop.f32.mrf.mxu0
      %v1491 = vadd.f32 %v1356, %v1490
      %v1492 = vpop.f32.mrf.mxu0
      %1493 = vmatprep.mubr.bf16.mxu0 0
      %1494 = vmatmul.mubr.bf16.gmra.mxu0 %v1339
      %v1495 = vpop.f32.mrf.mxu0
      %v1496 = vadd.f32 %v1356, %v1495
      %v1497 = vpop.f32.mrf.mxu0
      %v1498 = vpop.f32.mrf.mxu0
      %v1499 = vadd.f32 %v1356, %v1498
      %v1500 = vpop.f32.mrf.mxu0
      %1501 = vdwg.mxu0
      %v1502 = vmax.f32 %v1440, 0.0
      %v1503 = vmax.f32 %v1443, 0.0
      %v1504 = vmax.f32 %v1448, 0.0
      %v1505 = vmax.f32 %v1451, 0.0
      %v1506 = vmax.f32 %v1456, 0.0
      %v1507 = vmax.f32 %v1459, 0.0
      %v1508 = vmax.f32 %v1464, 0.0
      %v1509 = vmax.f32 %v1467, 0.0
      %v1510 = vmax.f32 %v1472, 0.0
      %v1511 = vmax.f32 %v1475, 0.0
      %v1512 = vmax.f32 %v1480, 0.0
      %v1513 = vmax.f32 %v1483, 0.0
      %v1514 = vmax.f32 %v1488, 0.0
      %v1515 = vmax.f32 %v1491, 0.0
      %v1516 = vmax.f32 %v1496, 0.0
      %v1517 = vmax.f32 %v1499, 0.0
      %v1518 = vpack.c.bf16 %v1503, %v1502
      %v1519 = vpack.c.bf16 %v1505, %v1504
      %v1520 = vpack.c.bf16 %v1507, %v1506
      %v1521 = vpack.c.bf16 %v1509, %v1508
      %v1522 = vpack.c.bf16 %v1511, %v1510
      %v1523 = vpack.c.bf16 %v1513, %v1512
      %v1524 = vpack.c.bf16 %v1515, %v1514
      %v1525 = vpack.c.bf16 %v1517, %v1516
      %v1526 = vld [vmem:[%s3] sm:$0xf]
      %v1527 = vld [vmem:[%s3 + $0x4] sm:$0xf]
      %v1528 = vld [vmem:[%s3 + $0x8] sm:$0xf]
      %v1529 = vld [vmem:[%s3 + $0xc] sm:$0xf]
      %v1530 = vld [vmem:[%s3 + $0x10] sm:$0xf]
      %v1531 = vld [vmem:[%s3 + $0x14] sm:$0xf]
      %v1532 = vld [vmem:[%s3 + $0x18] sm:$0xf]
      %v1533 = vld [vmem:[%s3 + $0x1c] sm:$0xf]
      %v1534 = vld [vmem:[%s8 + $0x2] ss:$0 sm:$0xff]
      %v1543 = vunpack.c.l.b16 %v1526
      %v1544 = vunpack.c.l.b16 %v1527
      %v1545 = vunpack.c.l.b16 %v1528
      %v1546 = vunpack.c.l.b16 %v1529
      %v1547 = vunpack.c.l.b16 %v1530
      %v1548 = vunpack.c.l.b16 %v1531
      %v1549 = vunpack.c.l.b16 %v1532
      %v1550 = vunpack.c.l.b16 %v1533
      %v1551 = vpack.c.b16 %v1544, %v1543
      %v1552 = vpack.c.b16 %v1546, %v1545
      %v1553 = vpack.c.b16 %v1548, %v1547
      %v1554 = vpack.c.b16 %v1550, %v1549
      %vm1559 = vcmask 523264
      %v1561 = vsel %vm1559, %v1518, 0
      %v1564 = vsel %vm1559, %v1519, 0
      %v1567 = vsel %vm1559, %v1520, 0
      %v1570 = vsel %vm1559, %v1521, 0
      %v1573 = vsel %vm1559, %v1522, 0
      %v1576 = vsel %vm1559, %v1523, 0
      %v1579 = vsel %vm1559, %v1524, 0
      %v1582 = vsel %vm1559, %v1525, 0
      %1584 = vmatprep.subr.bf16.mxu0 0
      %1585 = vmatpush1.bf16.msra.mxu0 0
      %1586 = vmatprep.subr.bf16.mxu0 0
      %1587 = vmatpush1.bf16.msra.mxu0 0
      %1588 = vmatprep.subr.bf16.mxu0 0
      %1589 = vmatpush1.bf16.msra.mxu0 0
      %1590 = vmatprep.subr.bf16.mxu0 0
      %1591 = vmatpush1.bf16.msra.mxu0 0
      %1592 = vmatprep.subr.bf16.mxu0 0
      %1593 = vmatpush1.bf16.msra.mxu0 %v1554
      %1594 = vmatprep.subr.bf16.mxu0 0
      %1595 = vmatpush1.bf16.msra.mxu0 %v1553
      %1596 = vmatprep.subr.bf16.mxu0 0
      %1597 = vmatpush1.bf16.msra.mxu0 %v1552
      %1598 = vmatprep.subr.bf16.mxu0 0
      %1599 = vmatpush1.bf16.msra.mxu0 %v1551
      %1600 = vmatprep.subr.bf16.mxu0 0
      %1601 = vmatpush2.bf16.msra.mxu0 0
      %1602 = vmatprep.subr.bf16.mxu0 0
      %1603 = vmatpush2.bf16.msra.mxu0 0
      %1604 = vmatprep.subr.bf16.mxu0 0
      %1605 = vmatpush2.bf16.msra.mxu0 0
      %1606 = vmatprep.subr.bf16.mxu0 0
      %1607 = vmatpush2.bf16.msra.mxu0 0
      %1608 = vmatprep.subr.bf16.mxu0 0
      %1609 = vmatpush2.bf16.msra.mxu0 0
      %1610 = vmatprep.subr.bf16.mxu0 0
      %1611 = vmatpush2.bf16.msra.mxu0 0
      %1612 = vmatprep.subr.bf16.mxu0 0
      %1613 = vmatpush2.bf16.msra.mxu0 0
      %1614 = vmatprep.subr.bf16.mxu0 0
      %1615 = vmatpush2.bf16.msra.mxu0 0
      %1616 = vmatprep.mubr.bf16.mxu0 0
      %1617 = vmatmul.mubr.bf16.gmra.mxu0 %v1561
      %v1618 = vpop.f32.mrf.mxu0
      %v1619 = vadd.f32 %v1534, %v1618
      %v1620 = vpop.f32.mrf.mxu0
      %v1621 = vpop.f32.mrf.mxu0
      %v1622 = vadd.f32 %v1534, %v1621
      %v1623 = vpop.f32.mrf.mxu0
      %1624 = vmatprep.mubr.bf16.mxu0 0
      %1625 = vmatmul.mubr.bf16.gmra.mxu0 %v1564
      %v1626 = vpop.f32.mrf.mxu0
      %v1627 = vadd.f32 %v1534, %v1626
      %v1628 = vpop.f32.mrf.mxu0
      %v1629 = vpop.f32.mrf.mxu0
      %v1630 = vadd.f32 %v1534, %v1629
      %v1631 = vpop.f32.mrf.mxu0
      %1632 = vmatprep.mubr.bf16.mxu0 0
      %1633 = vmatmul.mubr.bf16.gmra.mxu0 %v1567
      %v1634 = vpop.f32.mrf.mxu0
      %v1635 = vadd.f32 %v1534, %v1634
      %v1636 = vpop.f32.mrf.mxu0
      %v1637 = vpop.f32.mrf.mxu0
      %v1638 = vadd.f32 %v1534, %v1637
      %v1639 = vpop.f32.mrf.mxu0
      %1640 = vmatprep.mubr.bf16.mxu0 0
      %1641 = vmatmul.mubr.bf16.gmra.mxu0 %v1570
      %v1642 = vpop.f32.mrf.mxu0
      %v1643 = vadd.f32 %v1534, %v1642
      %v1644 = vpop.f32.mrf.mxu0
      %v1645 = vpop.f32.mrf.mxu0
      %v1646 = vadd.f32 %v1534, %v1645
      %v1647 = vpop.f32.mrf.mxu0
      %1648 = vmatprep.mubr.bf16.mxu0 0
      %1649 = vmatmul.mubr.bf16.gmra.mxu0 %v1573
      %v1650 = vpop.f32.mrf.mxu0
      %v1651 = vadd.f32 %v1534, %v1650
      %v1652 = vpop.f32.mrf.mxu0
      %v1653 = vpop.f32.mrf.mxu0
      %v1654 = vadd.f32 %v1534, %v1653
      %v1655 = vpop.f32.mrf.mxu0
      %1656 = vmatprep.mubr.bf16.mxu0 0
      %1657 = vmatmul.mubr.bf16.gmra.mxu0 %v1576
      %v1658 = vpop.f32.mrf.mxu0
      %v1659 = vadd.f32 %v1534, %v1658
      %v1660 = vpop.f32.mrf.mxu0
      %v1661 = vpop.f32.mrf.mxu0
      %v1662 = vadd.f32 %v1534, %v1661
      %v1663 = vpop.f32.mrf.mxu0
      %1664 = vmatprep.mubr.bf16.mxu0 0
      %1665 = vmatmul.mubr.bf16.gmra.mxu0 %v1579
      %v1666 = vpop.f32.mrf.mxu0
      %v1667 = vadd.f32 %v1534, %v1666
      %v1668 = vpop.f32.mrf.mxu0
      %v1669 = vpop.f32.mrf.mxu0
      %v1670 = vadd.f32 %v1534, %v1669
      %v1671 = vpop.f32.mrf.mxu0
      %1672 = vmatprep.mubr.bf16.mxu0 0
      %1673 = vmatmul.mubr.bf16.gmra.mxu0 %v1582
      %v1674 = vpop.f32.mrf.mxu0
      %v1675 = vadd.f32 %v1534, %v1674
      %v1676 = vpop.f32.mrf.mxu0
      %v1677 = vpop.f32.mrf.mxu0
      %v1678 = vadd.f32 %v1534, %v1677
      %v1679 = vpop.f32.mrf.mxu0
      %1680 = vdwg.mxu0
      %v1681 = vmax.f32 %v1619, 0.0
      %v1682 = vmax.f32 %v1622, 0.0
      %v1683 = vmax.f32 %v1627, 0.0
      %v1684 = vmax.f32 %v1630, 0.0
      %v1685 = vmax.f32 %v1635, 0.0
      %v1686 = vmax.f32 %v1638, 0.0
      %v1687 = vmax.f32 %v1643, 0.0
      %v1688 = vmax.f32 %v1646, 0.0
      %v1689 = vmax.f32 %v1651, 0.0
      %v1690 = vmax.f32 %v1654, 0.0
      %v1691 = vmax.f32 %v1659, 0.0
      %v1692 = vmax.f32 %v1662, 0.0
      %v1693 = vmax.f32 %v1667, 0.0
      %v1694 = vmax.f32 %v1670, 0.0
      %v1695 = vmax.f32 %v1675, 0.0
      %v1696 = vmax.f32 %v1678, 0.0
      %v1697 = vpack.c.bf16 %v1682, %v1681
      %v1698 = vpack.c.bf16 %v1684, %v1683
      %v1699 = vpack.c.bf16 %v1686, %v1685
      %v1700 = vpack.c.bf16 %v1688, %v1687
      %v1701 = vpack.c.bf16 %v1690, %v1689
      %v1702 = vpack.c.bf16 %v1692, %v1691
      %v1703 = vpack.c.bf16 %v1694, %v1693
      %v1704 = vpack.c.bf16 %v1696, %v1695
      %v1705 = vld [vmem:[%s4] sm:$0xf]
      %v1706 = vld [vmem:[%s4 + $0x4] sm:$0x3]
      %v1707 = vld [vmem:[%s8 + $0x3] ss:$0 sm:$0xff]
      %v1710 = vunpack.c.l.b16 %v1705
      %v1711 = vunpack.c.l.b16 %v1706
      %v1712 = vpack.c.b16 %v1711, %v1710
      %vm1713 = vcmask 97280
      %v1715 = vsel %vm1713, %v1697, 0
      %v1718 = vsel %vm1713, %v1698, 0
      %v1721 = vsel %vm1713, %v1699, 0
      %v1724 = vsel %vm1713, %v1700, 0
      %v1727 = vsel %vm1713, %v1701, 0
      %v1730 = vsel %vm1713, %v1702, 0
      %v1733 = vsel %vm1713, %v1703, 0
      %v1736 = vsel %vm1713, %v1704, 0
      %vm1738 = vcmask 1045504
      %v1740 = vsel %vm1738, %v1712, 0
      %1742 = vmatprep.subr.bf16.mxu0 0
      %1743 = vmatpush1.bf16.msra.mxu0 0
      %1744 = vmatprep.subr.bf16.mxu0 0
      %1745 = vmatpush1.bf16.msra.mxu0 0
      %1746 = vmatprep.subr.bf16.mxu0 0
      %1747 = vmatpush1.bf16.msra.mxu0 0
      %1748 = vmatprep.subr.bf16.mxu0 0
      %1749 = vmatpush1.bf16.msra.mxu0 0
      %1750 = vmatprep.subr.bf16.mxu0 0
      %1751 = vmatpush1.bf16.msra.mxu0 0
      %1752 = vmatprep.subr.bf16.mxu0 0
      %1753 = vmatpush1.bf16.msra.mxu0 0
      %1754 = vmatprep.subr.bf16.mxu0 0
      %1755 = vmatpush1.bf16.msra.mxu0 0
      %1756 = vmatprep.subr.bf16.mxu0 0
      %1757 = vmatpush1.bf16.msra.mxu0 %v1740
      %1758 = vmatprep.subr.bf16.mxu0 0
      %1759 = vmatpush2.bf16.msra.mxu0 0
      %1760 = vmatprep.subr.bf16.mxu0 0
      %1761 = vmatpush2.bf16.msra.mxu0 0
      %1762 = vmatprep.subr.bf16.mxu0 0
      %1763 = vmatpush2.bf16.msra.mxu0 0
      %1764 = vmatprep.subr.bf16.mxu0 0
      %1765 = vmatpush2.bf16.msra.mxu0 0
      %1766 = vmatprep.subr.bf16.mxu0 0
      %1767 = vmatpush2.bf16.msra.mxu0 0
      %1768 = vmatprep.subr.bf16.mxu0 0
      %1769 = vmatpush2.bf16.msra.mxu0 0
      %1770 = vmatprep.subr.bf16.mxu0 0
      %1771 = vmatpush2.bf16.msra.mxu0 0
      %1772 = vmatprep.subr.bf16.mxu0 0
      %1773 = vmatpush2.bf16.msra.mxu0 0
      %1774 = vmatprep.mubr.bf16.mxu0 0
      %1775 = vmatmul.mubr.bf16.gmra.mxu0 %v1715
      %v1776 = vpop.f32.mrf.mxu0
      %v1777 = vadd.f32 %v1707, %v1776
      %v1778 = vpop.f32.mrf.mxu0
      %v1779 = vpop.f32.mrf.mxu0
      %v1780 = vadd.f32 %v1707, %v1779
      %v1781 = vpop.f32.mrf.mxu0
      %1782 = vmatprep.mubr.bf16.mxu0 0
      %1783 = vmatmul.mubr.bf16.gmra.mxu0 %v1718
      %v1784 = vpop.f32.mrf.mxu0
      %v1785 = vadd.f32 %v1707, %v1784
      %v1786 = vpop.f32.mrf.mxu0
      %v1787 = vpop.f32.mrf.mxu0
      %v1788 = vadd.f32 %v1707, %v1787
      %v1789 = vpop.f32.mrf.mxu0
      %1790 = vmatprep.mubr.bf16.mxu0 0
      %1791 = vmatmul.mubr.bf16.gmra.mxu0 %v1721
      %v1792 = vpop.f32.mrf.mxu0
      %v1793 = vadd.f32 %v1707, %v1792
      %v1794 = vpop.f32.mrf.mxu0
      %v1795 = vpop.f32.mrf.mxu0
      %v1796 = vadd.f32 %v1707, %v1795
      %v1797 = vpop.f32.mrf.mxu0
      %1798 = vmatprep.mubr.bf16.mxu0 0
      %1799 = vmatmul.mubr.bf16.gmra.mxu0 %v1724
      %v1800 = vpop.f32.mrf.mxu0
      %v1801 = vadd.f32 %v1707, %v1800
      %v1802 = vpop.f32.mrf.mxu0
      %v1803 = vpop.f32.mrf.mxu0
      %v1804 = vadd.f32 %v1707, %v1803
      %v1805 = vpop.f32.mrf.mxu0
      %1806 = vmatprep.mubr.bf16.mxu0 0
      %1807 = vmatmul.mubr.bf16.gmra.mxu0 %v1727
      %v1808 = vpop.f32.mrf.mxu0
      %v1809 = vadd.f32 %v1707, %v1808
      %v1810 = vpop.f32.mrf.mxu0
      %v1811 = vpop.f32.mrf.mxu0
      %v1812 = vadd.f32 %v1707, %v1811
      %v1813 = vpop.f32.mrf.mxu0
      %1814 = vmatprep.mubr.bf16.mxu0 0
      %1815 = vmatmul.mubr.bf16.gmra.mxu0 %v1730
      %v1816 = vpop.f32.mrf.mxu0
      %v1817 = vadd.f32 %v1707, %v1816
      %v1818 = vpop.f32.mrf.mxu0
      %v1819 = vpop.f32.mrf.mxu0
      %v1820 = vadd.f32 %v1707, %v1819
      %v1821 = vpop.f32.mrf.mxu0
      %1822 = vmatprep.mubr.bf16.mxu0 0
      %1823 = vmatmul.mubr.bf16.gmra.mxu0 %v1733
      %v1824 = vpop.f32.mrf.mxu0
      %v1825 = vadd.f32 %v1707, %v1824
      %v1826 = vpop.f32.mrf.mxu0
      %v1827 = vpop.f32.mrf.mxu0
      %v1828 = vadd.f32 %v1707, %v1827
      %v1829 = vpop.f32.mrf.mxu0
      %1830 = vmatprep.mubr.bf16.mxu0 0
      %1831 = vmatmul.mubr.bf16.gmra.mxu0 %v1736
      %v1832 = vpop.f32.mrf.mxu0
      %v1833 = vadd.f32 %v1707, %v1832
      %v1834 = vpop.f32.mrf.mxu0
      %v1835 = vpop.f32.mrf.mxu0
      %v1836 = vadd.f32 %v1707, %v1835
      %v1837 = vpop.f32.mrf.mxu0
      %1838 = vdwg.mxu0
      %v1839 = vmax.f32 %v1777, 0.0
      %v1840 = vmax.f32 %v1780, 0.0
      %v1841 = vmax.f32 %v1785, 0.0
      %v1842 = vmax.f32 %v1788, 0.0
      %v1843 = vmax.f32 %v1793, 0.0
      %v1844 = vmax.f32 %v1796, 0.0
      %v1845 = vmax.f32 %v1801, 0.0
      %v1846 = vmax.f32 %v1804, 0.0
      %v1847 = vmax.f32 %v1809, 0.0
      %v1848 = vmax.f32 %v1812, 0.0
      %v1849 = vmax.f32 %v1817, 0.0
      %v1850 = vmax.f32 %v1820, 0.0
      %v1851 = vmax.f32 %v1825, 0.0
      %v1852 = vmax.f32 %v1828, 0.0
      %v1853 = vmax.f32 %v1833, 0.0
      %v1854 = vmax.f32 %v1836, 0.0
      %v1855 = vpack.c.bf16 %v1840, %v1839
      %v1856 = vpack.c.bf16 %v1842, %v1841
      %v1857 = vpack.c.bf16 %v1844, %v1843
      %v1858 = vpack.c.bf16 %v1846, %v1845
      %v1859 = vpack.c.bf16 %v1848, %v1847
      %v1860 = vpack.c.bf16 %v1850, %v1849
      %v1861 = vpack.c.bf16 %v1852, %v1851
      %v1862 = vpack.c.bf16 %v1854, %v1853
      %v1863 = vld [vmem:[%s5] sm:$0xf]
      %v1864 = vld [vmem:[%s5 + $0x4] sm:$0x3]
      %v1865 = vld [vmem:[%s8 + $0x4] ss:$0 sm:$0xff]
      %v1868 = vunpack.c.l.b16 %v1863
      %v1869 = vunpack.c.l.b16 %v1864
      %v1870 = vpack.c.b16 %v1869, %v1868
      %v1872 = vsel %vm1713, %v1855, 0
      %v1875 = vsel %vm1713, %v1856, 0
      %v1878 = vsel %vm1713, %v1857, 0
      %v1881 = vsel %vm1713, %v1858, 0
      %v1884 = vsel %vm1713, %v1859, 0
      %v1887 = vsel %vm1713, %v1860, 0
      %v1890 = vsel %vm1713, %v1861, 0
      %v1893 = vsel %vm1713, %v1862, 0
      %v1896 = vsel %vm1738, %v1870, 0
      %1898 = vmatprep.subr.bf16.mxu0 0
      %1899 = vmatpush1.bf16.msra.mxu0 0
      %1900 = vmatprep.subr.bf16.mxu0 0
      %1901 = vmatpush1.bf16.msra.mxu0 0
      %1902 = vmatprep.subr.bf16.mxu0 0
      %1903 = vmatpush1.bf16.msra.mxu0 0
      %1904 = vmatprep.subr.bf16.mxu0 0
      %1905 = vmatpush1.bf16.msra.mxu0 0
      %1906 = vmatprep.subr.bf16.mxu0 0
      %1907 = vmatpush1.bf16.msra.mxu0 0
      %1908 = vmatprep.subr.bf16.mxu0 0
      %1909 = vmatpush1.bf16.msra.mxu0 0
      %1910 = vmatprep.subr.bf16.mxu0 0
      %1911 = vmatpush1.bf16.msra.mxu0 0
      %1912 = vmatprep.subr.bf16.mxu0 0
      %1913 = vmatpush1.bf16.msra.mxu0 %v1896
      %1914 = vmatprep.subr.bf16.mxu0 0
      %1915 = vmatpush2.bf16.msra.mxu0 0
      %1916 = vmatprep.subr.bf16.mxu0 0
      %1917 = vmatpush2.bf16.msra.mxu0 0
      %1918 = vmatprep.subr.bf16.mxu0 0
      %1919 = vmatpush2.bf16.msra.mxu0 0
      %1920 = vmatprep.subr.bf16.mxu0 0
      %1921 = vmatpush2.bf16.msra.mxu0 0
      %1922 = vmatprep.subr.bf16.mxu0 0
      %1923 = vmatpush2.bf16.msra.mxu0 0
      %1924 = vmatprep.subr.bf16.mxu0 0
      %1925 = vmatpush2.bf16.msra.mxu0 0
      %1926 = vmatprep.subr.bf16.mxu0 0
      %1927 = vmatpush2.bf16.msra.mxu0 0
      %1928 = vmatprep.subr.bf16.mxu0 0
      %1929 = vmatpush2.bf16.msra.mxu0 0
      %1930 = vmatprep.mubr.bf16.mxu0 0
      %1931 = vmatmul.mubr.bf16.gmra.mxu0 %v1872
      %v1932 = vpop.f32.mrf.mxu0
      %v1933 = vadd.f32 %v1865, %v1932
      %v1934 = vpop.f32.mrf.mxu0
      %v1935 = vpop.f32.mrf.mxu0
      %v1936 = vadd.f32 %v1865, %v1935
      %v1937 = vpop.f32.mrf.mxu0
      %1938 = vmatprep.mubr.bf16.mxu0 0
      %1939 = vmatmul.mubr.bf16.gmra.mxu0 %v1875
      %v1940 = vpop.f32.mrf.mxu0
      %v1941 = vadd.f32 %v1865, %v1940
      %v1942 = vpop.f32.mrf.mxu0
      %v1943 = vpop.f32.mrf.mxu0
      %v1944 = vadd.f32 %v1865, %v1943
      %v1945 = vpop.f32.mrf.mxu0
      %1946 = vmatprep.mubr.bf16.mxu0 0
      %1947 = vmatmul.mubr.bf16.gmra.mxu0 %v1878
      %v1948 = vpop.f32.mrf.mxu0
      %v1949 = vadd.f32 %v1865, %v1948
      %v1950 = vpop.f32.mrf.mxu0
      %v1951 = vpop.f32.mrf.mxu0
      %v1952 = vadd.f32 %v1865, %v1951
      %v1953 = vpop.f32.mrf.mxu0
      %1954 = vmatprep.mubr.bf16.mxu0 0
      %1955 = vmatmul.mubr.bf16.gmra.mxu0 %v1881
      %v1956 = vpop.f32.mrf.mxu0
      %v1957 = vadd.f32 %v1865, %v1956
      %v1958 = vpop.f32.mrf.mxu0
      %v1959 = vpop.f32.mrf.mxu0
      %v1960 = vadd.f32 %v1865, %v1959
      %v1961 = vpop.f32.mrf.mxu0
      %1962 = vmatprep.mubr.bf16.mxu0 0
      %1963 = vmatmul.mubr.bf16.gmra.mxu0 %v1884
      %v1964 = vpop.f32.mrf.mxu0
      %v1965 = vadd.f32 %v1865, %v1964
      %v1966 = vpop.f32.mrf.mxu0
      %v1967 = vpop.f32.mrf.mxu0
      %v1968 = vadd.f32 %v1865, %v1967
      %v1969 = vpop.f32.mrf.mxu0
      %1970 = vmatprep.mubr.bf16.mxu0 0
      %1971 = vmatmul.mubr.bf16.gmra.mxu0 %v1887
      %v1972 = vpop.f32.mrf.mxu0
      %v1973 = vadd.f32 %v1865, %v1972
      %v1974 = vpop.f32.mrf.mxu0
      %v1975 = vpop.f32.mrf.mxu0
      %v1976 = vadd.f32 %v1865, %v1975
      %v1977 = vpop.f32.mrf.mxu0
      %1978 = vmatprep.mubr.bf16.mxu0 0
      %1979 = vmatmul.mubr.bf16.gmra.mxu0 %v1890
      %v1980 = vpop.f32.mrf.mxu0
      %v1981 = vadd.f32 %v1865, %v1980
      %v1982 = vpop.f32.mrf.mxu0
      %v1983 = vpop.f32.mrf.mxu0
      %v1984 = vadd.f32 %v1865, %v1983
      %v1985 = vpop.f32.mrf.mxu0
      %1986 = vmatprep.mubr.bf16.mxu0 0
      %1987 = vmatmul.mubr.bf16.gmra.mxu0 %v1893
      %v1988 = vpop.f32.mrf.mxu0
      %v1989 = vadd.f32 %v1865, %v1988
      %v1990 = vpop.f32.mrf.mxu0
      %v1991 = vpop.f32.mrf.mxu0
      %v1992 = vadd.f32 %v1865, %v1991
      %v1993 = vpop.f32.mrf.mxu0
      %1994 = vdwg.mxu0
      %v1995 = vmax.f32 %v1933, 0.0
      %v1996 = vmax.f32 %v1936, 0.0
      %v1997 = vmax.f32 %v1941, 0.0
      %v1998 = vmax.f32 %v1944, 0.0
      %v1999 = vmax.f32 %v1949, 0.0
      %v2000 = vmax.f32 %v1952, 0.0
      %v2001 = vmax.f32 %v1957, 0.0
      %v2002 = vmax.f32 %v1960, 0.0
      %v2003 = vmax.f32 %v1965, 0.0
      %v2004 = vmax.f32 %v1968, 0.0
      %v2005 = vmax.f32 %v1973, 0.0
      %v2006 = vmax.f32 %v1976, 0.0
      %v2007 = vmax.f32 %v1981, 0.0
      %v2008 = vmax.f32 %v1984, 0.0
      %v2009 = vmax.f32 %v1989, 0.0
      %v2010 = vmax.f32 %v1992, 0.0
      %v2011 = vpack.c.bf16 %v1996, %v1995
      %v2012 = vpack.c.bf16 %v1998, %v1997
      %v2013 = vpack.c.bf16 %v2000, %v1999
      %v2014 = vpack.c.bf16 %v2002, %v2001
      %v2015 = vpack.c.bf16 %v2004, %v2003
      %v2016 = vpack.c.bf16 %v2006, %v2005
      %v2017 = vpack.c.bf16 %v2008, %v2007
      %v2018 = vpack.c.bf16 %v2010, %v2009
      %v2019 = vld [vmem:[%s6] sm:$0xf]
      %v2020 = vld [vmem:[%s6 + $0x4] sm:$0xf]
      %v2021 = vld [vmem:[%s6 + $0x8] sm:$0xf]
      %v2022 = vld [vmem:[%s6 + $0xc] sm:$0xf]
      %v2023 = vld [vmem:[%s6 + $0x10] sm:$0xf]
      %v2024 = vld [vmem:[%s6 + $0x14] sm:$0xf]
      %v2025 = vld [vmem:[%s6 + $0x18] sm:$0xf]
      %v2026 = vld [vmem:[%s6 + $0x1c] sm:$0xf]
      %v2027 = vld [vmem:[%s8 + $0x5] ss:$0 sm:$0xff]
      %v2036 = vunpack.c.l.b16 %v2019
      %v2037 = vunpack.c.l.b16 %v2020
      %v2038 = vunpack.c.l.b16 %v2021
      %v2039 = vunpack.c.l.b16 %v2022
      %v2040 = vunpack.c.l.b16 %v2023
      %v2041 = vunpack.c.l.b16 %v2024
      %v2042 = vunpack.c.l.b16 %v2025
      %v2043 = vunpack.c.l.b16 %v2026
      %v2044 = vpack.c.b16 %v2037, %v2036
      %v2045 = vpack.c.b16 %v2039, %v2038
      %v2046 = vpack.c.b16 %v2041, %v2040
      %v2047 = vpack.c.b16 %v2043, %v2042
      %v2053 = vsel %vm1559, %v2011, 0
      %v2056 = vsel %vm1559, %v2012, 0
      %v2059 = vsel %vm1559, %v2013, 0
      %v2062 = vsel %vm1559, %v2014, 0
      %v2065 = vsel %vm1559, %v2015, 0
      %v2068 = vsel %vm1559, %v2016, 0
      %v2071 = vsel %vm1559, %v2017, 0
      %v2074 = vsel %vm1559, %v2018, 0
      %2076 = vmatprep.subr.bf16.mxu0 0
      %2077 = vmatpush1.bf16.msra.mxu0 0
      %2078 = vmatprep.subr.bf16.mxu0 0
      %2079 = vmatpush1.bf16.msra.mxu0 0
      %2080 = vmatprep.subr.bf16.mxu0 0
      %2081 = vmatpush1.bf16.msra.mxu0 0
      %2082 = vmatprep.subr.bf16.mxu0 0
      %2083 = vmatpush1.bf16.msra.mxu0 0
      %2084 = vmatprep.subr.bf16.mxu0 0
      %2085 = vmatpush1.bf16.msra.mxu0 %v2047
      %2086 = vmatprep.subr.bf16.mxu0 0
      %2087 = vmatpush1.bf16.msra.mxu0 %v2046
      %2088 = vmatprep.subr.bf16.mxu0 0
      %2089 = vmatpush1.bf16.msra.mxu0 %v2045
      %2090 = vmatprep.subr.bf16.mxu0 0
      %2091 = vmatpush1.bf16.msra.mxu0 %v2044
      %2092 = vmatprep.subr.bf16.mxu0 0
      %2093 = vmatpush2.bf16.msra.mxu0 0
      %2094 = vmatprep.subr.bf16.mxu0 0
      %2095 = vmatpush2.bf16.msra.mxu0 0
      %2096 = vmatprep.subr.bf16.mxu0 0
      %2097 = vmatpush2.bf16.msra.mxu0 0
      %2098 = vmatprep.subr.bf16.mxu0 0
      %2099 = vmatpush2.bf16.msra.mxu0 0
      %2100 = vmatprep.subr.bf16.mxu0 0
      %2101 = vmatpush2.bf16.msra.mxu0 0
      %2102 = vmatprep.subr.bf16.mxu0 0
      %2103 = vmatpush2.bf16.msra.mxu0 0
      %2104 = vmatprep.subr.bf16.mxu0 0
      %2105 = vmatpush2.bf16.msra.mxu0 0
      %2106 = vmatprep.subr.bf16.mxu0 0
      %2107 = vmatpush2.bf16.msra.mxu0 0
      %2108 = vmatprep.mubr.bf16.mxu0 0
      %2109 = vmatmul.mubr.bf16.gmra.mxu0 %v2053
      %v2110 = vpop.f32.mrf.mxu0
      %v2111 = vadd.f32 %v2027, %v2110
      %v2112 = vpop.f32.mrf.mxu0
      %v2113 = vpop.f32.mrf.mxu0
      %v2114 = vadd.f32 %v2027, %v2113
      %v2115 = vpop.f32.mrf.mxu0
      %2116 = vmatprep.mubr.bf16.mxu0 0
      %2117 = vmatmul.mubr.bf16.gmra.mxu0 %v2056
      %v2118 = vpop.f32.mrf.mxu0
      %v2119 = vadd.f32 %v2027, %v2118
      %v2120 = vpop.f32.mrf.mxu0
      %v2121 = vpop.f32.mrf.mxu0
      %v2122 = vadd.f32 %v2027, %v2121
      %v2123 = vpop.f32.mrf.mxu0
      %2124 = vmatprep.mubr.bf16.mxu0 0
      %2125 = vmatmul.mubr.bf16.gmra.mxu0 %v2059
      %v2126 = vpop.f32.mrf.mxu0
      %v2127 = vadd.f32 %v2027, %v2126
      %v2128 = vpop.f32.mrf.mxu0
      %v2129 = vpop.f32.mrf.mxu0
      %v2130 = vadd.f32 %v2027, %v2129
      %v2131 = vpop.f32.mrf.mxu0
      %2132 = vmatprep.mubr.bf16.mxu0 0
      %2133 = vmatmul.mubr.bf16.gmra.mxu0 %v2062
      %v2134 = vpop.f32.mrf.mxu0
      %v2135 = vadd.f32 %v2027, %v2134
      %v2136 = vpop.f32.mrf.mxu0
      %v2137 = vpop.f32.mrf.mxu0
      %v2138 = vadd.f32 %v2027, %v2137
      %v2139 = vpop.f32.mrf.mxu0
      %2140 = vmatprep.mubr.bf16.mxu0 0
      %2141 = vmatmul.mubr.bf16.gmra.mxu0 %v2065
      %v2142 = vpop.f32.mrf.mxu0
      %v2143 = vadd.f32 %v2027, %v2142
      %v2144 = vpop.f32.mrf.mxu0
      %v2145 = vpop.f32.mrf.mxu0
      %v2146 = vadd.f32 %v2027, %v2145
      %v2147 = vpop.f32.mrf.mxu0
      %2148 = vmatprep.mubr.bf16.mxu0 0
      %2149 = vmatmul.mubr.bf16.gmra.mxu0 %v2068
      %v2150 = vpop.f32.mrf.mxu0
      %v2151 = vadd.f32 %v2027, %v2150
      %v2152 = vpop.f32.mrf.mxu0
      %v2153 = vpop.f32.mrf.mxu0
      %v2154 = vadd.f32 %v2027, %v2153
      %v2155 = vpop.f32.mrf.mxu0
      %2156 = vmatprep.mubr.bf16.mxu0 0
      %2157 = vmatmul.mubr.bf16.gmra.mxu0 %v2071
      %v2158 = vpop.f32.mrf.mxu0
      %v2159 = vadd.f32 %v2027, %v2158
      %v2160 = vpop.f32.mrf.mxu0
      %v2161 = vpop.f32.mrf.mxu0
      %v2162 = vadd.f32 %v2027, %v2161
      %v2163 = vpop.f32.mrf.mxu0
      %2164 = vmatprep.mubr.bf16.mxu0 0
      %2165 = vmatmul.mubr.bf16.gmra.mxu0 %v2074
      %v2166 = vpop.f32.mrf.mxu0
      %v2167 = vadd.f32 %v2027, %v2166
      %v2168 = vpop.f32.mrf.mxu0
      %v2169 = vpop.f32.mrf.mxu0
      %v2170 = vadd.f32 %v2027, %v2169
      %v2171 = vpop.f32.mrf.mxu0
      %2172 = vdwg.mxu0
      %v2173 = vmax.f32 %v2111, 0.0
      %v2174 = vmax.f32 %v2114, 0.0
      %v2175 = vmax.f32 %v2119, 0.0
      %v2176 = vmax.f32 %v2122, 0.0
      %v2177 = vmax.f32 %v2127, 0.0
      %v2178 = vmax.f32 %v2130, 0.0
      %v2179 = vmax.f32 %v2135, 0.0
      %v2180 = vmax.f32 %v2138, 0.0
      %v2181 = vmax.f32 %v2143, 0.0
      %v2182 = vmax.f32 %v2146, 0.0
      %v2183 = vmax.f32 %v2151, 0.0
      %v2184 = vmax.f32 %v2154, 0.0
      %v2185 = vmax.f32 %v2159, 0.0
      %v2186 = vmax.f32 %v2162, 0.0
      %v2187 = vmax.f32 %v2167, 0.0
      %v2188 = vmax.f32 %v2170, 0.0
      %v2189 = vpack.c.bf16 %v2174, %v2173
      %v2190 = vpack.c.bf16 %v2176, %v2175
      %v2191 = vpack.c.bf16 %v2178, %v2177
      %v2192 = vpack.c.bf16 %v2180, %v2179
      %v2193 = vpack.c.bf16 %v2182, %v2181
      %v2194 = vpack.c.bf16 %v2184, %v2183
      %v2195 = vpack.c.bf16 %v2186, %v2185
      %v2196 = vpack.c.bf16 %v2188, %v2187
      %v2197 = vld [vmem:[%s7] sm:$0xff]
      %v2198 = vld [vmem:[%s7 + $0x8] sm:$0xff]
      %v2199 = vld [vmem:[%s7 + $0x10] sm:$0xff]
      %v2200 = vld [vmem:[%s7 + $0x18] sm:$0xf]
      %v2201 = vld [vmem:[%s7 + $0x1c] sm:$0xff]
      %v2202 = vld [vmem:[%s7 + $0x24] sm:$0xff]
      %v2203 = vld [vmem:[%s7 + $0x2c] sm:$0xff]
      %v2204 = vld [vmem:[%s7 + $0x34] sm:$0xf]
      %v2205 = vld [vmem:[%s7 + $0x38] sm:$0xff]
      %v2206 = vld [vmem:[%s7 + $0x40] sm:$0xff]
      %v2207 = vld [vmem:[%s7 + $0x48] sm:$0xff]
      %v2208 = vld [vmem:[%s7 + $0x50] sm:$0xf]
      %v2209 = vld [vmem:[%s7 + $0x54] sm:$0xff]
      %v2210 = vld [vmem:[%s7 + $0x5c] sm:$0xff]
      %v2211 = vld [vmem:[%s7 + $0x64] sm:$0xff]
      %v2212 = vld [vmem:[%s7 + $0x6c] sm:$0xf]
      %v2213 = vld [vmem:[%s7 + $0x70] sm:$0xff]
      %v2214 = vld [vmem:[%s7 + $0x78] sm:$0xff]
      %v2215 = vld [vmem:[%s7 + $0x80] sm:$0xff]
      %v2216 = vld [vmem:[%s7 + $0x88] sm:$0xf]
      %v2217 = vld [vmem:[%s7 + $0x8c] sm:$0xff]
      %v2218 = vld [vmem:[%s7 + $0x94] sm:$0xff]
      %v2219 = vld [vmem:[%s7 + $0x9c] sm:$0xff]
      %v2220 = vld [vmem:[%s7 + $0xa4] sm:$0xf]
      %v2221 = vld [vmem:[%s7 + $0xa8] sm:$0xff]
      %v2222 = vld [vmem:[%s7 + $0xb0] sm:$0xff]
      %v2223 = vld [vmem:[%s7 + $0xb8] sm:$0xff]
      %v2224 = vld [vmem:[%s7 + $0xc0] sm:$0xf]
      %v2225 = vld [vmem:[%s7 + $0xc4] sm:$0xff]
      %v2226 = vld [vmem:[%s7 + $0xcc] sm:$0xff]
      %v2227 = vld [vmem:[%s7 + $0xd4] sm:$0xff]
      %v2228 = vld [vmem:[%s7 + $0xdc] sm:$0xf]
      %v2229 = vld [vmem:[%s7 + $0xe0] sm:$0xff]
      %v2230 = vld [vmem:[%s7 + $0xe8] sm:$0xff]
      %v2231 = vld [vmem:[%s7 + $0xf0] sm:$0xff]
      %v2232 = vld [vmem:[%s7 + $0xf8] sm:$0xf]
      %v2233 = vld [vmem:[%s7 + $0xfc] sm:$0xff]
      %v2234 = vld [vmem:[%s7 + $0x104] sm:$0xff]
      %v2235 = vld [vmem:[%s7 + $0x10c] sm:$0xff]
      %v2236 = vld [vmem:[%s7 + $0x114] sm:$0xf]
      %v2237 = vld [vmem:[%s7 + $0x118] sm:$0xff]
      %v2238 = vld [vmem:[%s7 + $0x120] sm:$0xff]
      %v2239 = vld [vmem:[%s7 + $0x128] sm:$0xff]
      %v2240 = vld [vmem:[%s7 + $0x130] sm:$0xf]
      %v2241 = vld [vmem:[%s7 + $0x134] sm:$0xff]
      %v2242 = vld [vmem:[%s7 + $0x13c] sm:$0xff]
      %v2243 = vld [vmem:[%s7 + $0x144] sm:$0xff]
      %v2244 = vld [vmem:[%s7 + $0x14c] sm:$0xf]
      %v2245 = vld [vmem:[%s7 + $0x150] sm:$0xff]
      %v2246 = vld [vmem:[%s7 + $0x158] sm:$0xff]
      %v2247 = vld [vmem:[%s7 + $0x160] sm:$0xff]
      %v2248 = vld [vmem:[%s7 + $0x168] sm:$0xf]
      %v2249 = vld [vmem:[%s7 + $0x16c] sm:$0xff]
      %v2250 = vld [vmem:[%s7 + $0x174] sm:$0xff]
      %v2251 = vld [vmem:[%s7 + $0x17c] sm:$0xff]
      %v2252 = vld [vmem:[%s7 + $0x184] sm:$0xf]
      %v2253 = vld [vmem:[%s7 + $0x188] sm:$0xff]
      %v2254 = vld [vmem:[%s7 + $0x190] sm:$0xff]
      %v2255 = vld [vmem:[%s7 + $0x198] sm:$0xff]
      %v2256 = vld [vmem:[%s7 + $0x1a0] sm:$0xf]
      %v2257 = vld [vmem:[%s7 + $0x1a4] sm:$0xff]
      %v2258 = vld [vmem:[%s7 + $0x1ac] sm:$0xff]
      %v2259 = vld [vmem:[%s7 + $0x1b4] sm:$0xff]
      %v2260 = vld [vmem:[%s7 + $0x1bc] sm:$0xf]
      %s2261 = scalar_lea.vmem %s8, 6
      %v2262 = vld [vmem:[%s2261] ss:$8 sm:$0xf]
      %v2263 = vld [vmem:[%s2261] ss:$8 sm:$0x70]
      %v2264 = vor.u32 %v2262, %v2263
      %v2266 = vlaneseq
      %v2267 = vshrl.u32 %v2266, 7
      %v2268 = vsub.s32 0, %v2267
      %v2269 = vrot.slane %v2264, %v2268
      %v2270 = vlaneseq
      %v2271 = vshrl.u32 %v2270, 7
      %v2272 = vsub.s32 1, %v2271
      %v2273 = vrot.slane %v2264, %v2272
      %v2274 = vlaneseq
      %v2275 = vshrl.u32 %v2274, 7
      %v2276 = vsub.s32 2, %v2275
      %v2277 = vrot.slane %v2264, %v2276
      %v2278 = vlaneseq
      %v2279 = vshrl.u32 %v2278, 7
      %v2280 = vsub.s32 3, %v2279
      %v2281 = vrot.slane %v2264, %v2280
      %v2282 = vlaneseq
      %v2283 = vshrl.u32 %v2282, 7
      %v2284 = vsub.s32 4, %v2283
      %v2285 = vrot.slane %v2264, %v2284
      %v2286 = vlaneseq
      %v2287 = vshrl.u32 %v2286, 7
      %v2288 = vsub.s32 5, %v2287
      %v2289 = vrot.slane %v2264, %v2288
      %v2290 = vlaneseq
      %v2291 = vshrl.u32 %v2290, 7
      %v2292 = vsub.s32 6, %v2291
      %v2293 = vrot.slane %v2264, %v2292
      %v2365 = vunpack.c.l.b16 %v2197
      %v2366 = vunpack.c.h.b16 %v2197
      %v2367 = vunpack.c.l.b16 %v2198
      %v2368 = vunpack.c.h.b16 %v2198
      %v2369 = vunpack.c.l.b16 %v2199
      %v2370 = vunpack.c.h.b16 %v2199
      %v2371 = vunpack.c.l.b16 %v2200
      %v2372 = vunpack.c.l.b16 %v2201
      %v2373 = vunpack.c.h.b16 %v2201
      %v2374 = vunpack.c.l.b16 %v2202
      %v2375 = vunpack.c.h.b16 %v2202
      %v2376 = vunpack.c.l.b16 %v2203
      %v2377 = vunpack.c.h.b16 %v2203
      %v2378 = vunpack.c.l.b16 %v2204
      %v2379 = vunpack.c.l.b16 %v2205
      %v2380 = vunpack.c.h.b16 %v2205
      %v2381 = vunpack.c.l.b16 %v2206
      %v2382 = vunpack.c.h.b16 %v2206
      %v2383 = vunpack.c.l.b16 %v2207
      %v2384 = vunpack.c.h.b16 %v2207
      %v2385 = vunpack.c.l.b16 %v2208
      %v2386 = vunpack.c.l.b16 %v2209
      %v2387 = vunpack.c.h.b16 %v2209
      %v2388 = vunpack.c.l.b16 %v2210
      %v2389 = vunpack.c.h.b16 %v2210
      %v2390 = vunpack.c.l.b16 %v2211
      %v2391 = vunpack.c.h.b16 %v2211
      %v2392 = vunpack.c.l.b16 %v2212
      %v2393 = vunpack.c.l.b16 %v2213
      %v2394 = vunpack.c.h.b16 %v2213
      %v2395 = vunpack.c.l.b16 %v2214
      %v2396 = vunpack.c.h.b16 %v2214
      %v2397 = vunpack.c.l.b16 %v2215
      %v2398 = vunpack.c.h.b16 %v2215
      %v2399 = vunpack.c.l.b16 %v2216
      %v2400 = vunpack.c.l.b16 %v2217
      %v2401 = vunpack.c.h.b16 %v2217
      %v2402 = vunpack.c.l.b16 %v2218
      %v2403 = vunpack.c.h.b16 %v2218
      %v2404 = vunpack.c.l.b16 %v2219
      %v2405 = vunpack.c.h.b16 %v2219
      %v2406 = vunpack.c.l.b16 %v2220
      %v2407 = vunpack.c.l.b16 %v2221
      %v2408 = vunpack.c.h.b16 %v2221
      %v2409 = vunpack.c.l.b16 %v2222
      %v2410 = vunpack.c.h.b16 %v2222
      %v2411 = vunpack.c.l.b16 %v2223
      %v2412 = vunpack.c.h.b16 %v2223
      %v2413 = vunpack.c.l.b16 %v2224
      %v2414 = vunpack.c.l.b16 %v2225
      %v2415 = vunpack.c.h.b16 %v2225
      %v2416 = vunpack.c.l.b16 %v2226
      %v2417 = vunpack.c.h.b16 %v2226
      %v2418 = vunpack.c.l.b16 %v2227
      %v2419 = vunpack.c.h.b16 %v2227
      %v2420 = vunpack.c.l.b16 %v2228
      %v2421 = vunpack.c.l.b16 %v2229
      %v2422 = vunpack.c.h.b16 %v2229
      %v2423 = vunpack.c.l.b16 %v2230
      %v2424 = vunpack.c.h.b16 %v2230
      %v2425 = vunpack.c.l.b16 %v2231
      %v2426 = vunpack.c.h.b16 %v2231
      %v2427 = vunpack.c.l.b16 %v2232
      %v2428 = vunpack.c.l.b16 %v2233
      %v2429 = vunpack.c.h.b16 %v2233
      %v2430 = vunpack.c.l.b16 %v2234
      %v2431 = vunpack.c.h.b16 %v2234
      %v2432 = vunpack.c.l.b16 %v2235
      %v2433 = vunpack.c.h.b16 %v2235
      %v2434 = vunpack.c.l.b16 %v2236
      %v2435 = vunpack.c.l.b16 %v2237
      %v2436 = vunpack.c.h.b16 %v2237
      %v2437 = vunpack.c.l.b16 %v2238
      %v2438 = vunpack.c.h.b16 %v2238
      %v2439 = vunpack.c.l.b16 %v2239
      %v2440 = vunpack.c.h.b16 %v2239
      %v2441 = vunpack.c.l.b16 %v2240
      %v2442 = vunpack.c.l.b16 %v2241
      %v2443 = vunpack.c.h.b16 %v2241
      %v2444 = vunpack.c.l.b16 %v2242
      %v2445 = vunpack.c.h.b16 %v2242
      %v2446 = vunpack.c.l.b16 %v2243
      %v2447 = vunpack.c.h.b16 %v2243
      %v2448 = vunpack.c.l.b16 %v2244
      %v2449 = vunpack.c.l.b16 %v2245
      %v2450 = vunpack.c.h.b16 %v2245
      %v2451 = vunpack.c.l.b16 %v2246
      %v2452 = vunpack.c.h.b16 %v2246
      %v2453 = vunpack.c.l.b16 %v2247
      %v2454 = vunpack.c.h.b16 %v2247
      %v2455 = vunpack.c.l.b16 %v2248
      %v2456 = vunpack.c.l.b16 %v2249
      %v2457 = vunpack.c.h.b16 %v2249
      %v2458 = vunpack.c.l.b16 %v2250
      %v2459 = vunpack.c.h.b16 %v2250
      %v2460 = vunpack.c.l.b16 %v2251
      %v2461 = vunpack.c.h.b16 %v2251
      %v2462 = vunpack.c.l.b16 %v2252
      %v2463 = vunpack.c.l.b16 %v2253
      %v2464 = vunpack.c.h.b16 %v2253
      %v2465 = vunpack.c.l.b16 %v2254
      %v2466 = vunpack.c.h.b16 %v2254
      %v2467 = vunpack.c.l.b16 %v2255
      %v2468 = vunpack.c.h.b16 %v2255
      %v2469 = vunpack.c.l.b16 %v2256
      %v2470 = vunpack.c.l.b16 %v2257
      %v2471 = vunpack.c.h.b16 %v2257
      %v2472 = vunpack.c.l.b16 %v2258
      %v2473 = vunpack.c.h.b16 %v2258
      %v2474 = vunpack.c.l.b16 %v2259
      %v2475 = vunpack.c.h.b16 %v2259
      %v2476 = vunpack.c.l.b16 %v2260
      %v2477 = vpack.c.b16 %v2372, %v2365
      %v2478 = vpack.c.b16 %v2373, %v2366
      %v2479 = vpack.c.b16 %v2374, %v2367
      %v2480 = vpack.c.b16 %v2375, %v2368
      %v2481 = vpack.c.b16 %v2376, %v2369
      %v2482 = vpack.c.b16 %v2377, %v2370
      %v2483 = vpack.c.b16 %v2378, %v2371
      %v2484 = vpack.c.b16 %v2386, %v2379
      %v2485 = vpack.c.b16 %v2387, %v2380
      %v2486 = vpack.c.b16 %v2388, %v2381
      %v2487 = vpack.c.b16 %v2389, %v2382
      %v2488 = vpack.c.b16 %v2390, %v2383
      %v2489 = vpack.c.b16 %v2391, %v2384
      %v2490 = vpack.c.b16 %v2392, %v2385
      %v2491 = vpack.c.b16 %v2400, %v2393
      %v2492 = vpack.c.b16 %v2401, %v2394
      %v2493 = vpack.c.b16 %v2402, %v2395
      %v2494 = vpack.c.b16 %v2403, %v2396
      %v2495 = vpack.c.b16 %v2404, %v2397
      %v2496 = vpack.c.b16 %v2405, %v2398
      %v2497 = vpack.c.b16 %v2406, %v2399
      %v2498 = vpack.c.b16 %v2414, %v2407
      %v2499 = vpack.c.b16 %v2415, %v2408
      %v2500 = vpack.c.b16 %v2416, %v2409
      %v2501 = vpack.c.b16 %v2417, %v2410
      %v2502 = vpack.c.b16 %v2418, %v2411
      %v2503 = vpack.c.b16 %v2419, %v2412
      %v2504 = vpack.c.b16 %v2420, %v2413
      %v2505 = vpack.c.b16 %v2428, %v2421
      %v2506 = vpack.c.b16 %v2429, %v2422
      %v2507 = vpack.c.b16 %v2430, %v2423
      %v2508 = vpack.c.b16 %v2431, %v2424
      %v2509 = vpack.c.b16 %v2432, %v2425
      %v2510 = vpack.c.b16 %v2433, %v2426
      %v2511 = vpack.c.b16 %v2434, %v2427
      %v2512 = vpack.c.b16 %v2442, %v2435
      %v2513 = vpack.c.b16 %v2443, %v2436
      %v2514 = vpack.c.b16 %v2444, %v2437
      %v2515 = vpack.c.b16 %v2445, %v2438
      %v2516 = vpack.c.b16 %v2446, %v2439
      %v2517 = vpack.c.b16 %v2447, %v2440
      %v2518 = vpack.c.b16 %v2448, %v2441
      %v2519 = vpack.c.b16 %v2456, %v2449
      %v2520 = vpack.c.b16 %v2457, %v2450
      %v2521 = vpack.c.b16 %v2458, %v2451
      %v2522 = vpack.c.b16 %v2459, %v2452
      %v2523 = vpack.c.b16 %v2460, %v2453
      %v2524 = vpack.c.b16 %v2461, %v2454
      %v2525 = vpack.c.b16 %v2462, %v2455
      %v2526 = vpack.c.b16 %v2470, %v2463
      %v2527 = vpack.c.b16 %v2471, %v2464
      %v2528 = vpack.c.b16 %v2472, %v2465
      %v2529 = vpack.c.b16 %v2473, %v2466
      %v2530 = vpack.c.b16 %v2474, %v2467
      %v2531 = vpack.c.b16 %v2475, %v2468
      %v2532 = vpack.c.b16 %v2476, %v2469
      %2589 = vmatprep.subr.bf16.mxu0 %v2527
      %2590 = vmatpush1.bf16.msra.mxu0 %v2526
      %2591 = vmatprep.subr.bf16.mxu0 %v2520
      %2592 = vmatpush1.bf16.msra.mxu0 %v2519
      %2593 = vmatprep.subr.bf16.mxu0 %v2513
      %2594 = vmatpush1.bf16.msra.mxu0 %v2512
      %2595 = vmatprep.subr.bf16.mxu0 %v2506
      %2596 = vmatpush1.bf16.msra.mxu0 %v2505
      %2597 = vmatprep.subr.bf16.mxu0 %v2499
      %2598 = vmatpush1.bf16.msra.mxu0 %v2498
      %2599 = vmatprep.subr.bf16.mxu0 %v2492
      %2600 = vmatpush1.bf16.msra.mxu0 %v2491
      %2601 = vmatprep.subr.bf16.mxu0 %v2485
      %2602 = vmatpush1.bf16.msra.mxu0 %v2484
      %2603 = vmatprep.subr.bf16.mxu0 %v2478
      %2604 = vmatpush1.bf16.msra.mxu0 %v2477
      %2605 = vmatprep.subr.bf16.mxu0 0
      %2606 = vmatpush2.bf16.msra.mxu0 0
      %2607 = vmatprep.subr.bf16.mxu0 0
      %2608 = vmatpush2.bf16.msra.mxu0 0
      %2609 = vmatprep.subr.bf16.mxu0 0
      %2610 = vmatpush2.bf16.msra.mxu0 0
      %2611 = vmatprep.subr.bf16.mxu0 0
      %2612 = vmatpush2.bf16.msra.mxu0 0
      %2613 = vmatprep.subr.bf16.mxu0 0
      %2614 = vmatpush2.bf16.msra.mxu0 0
      %2615 = vmatprep.subr.bf16.mxu0 0
      %2616 = vmatpush2.bf16.msra.mxu0 0
      %2617 = vmatprep.subr.bf16.mxu0 0
      %2618 = vmatpush2.bf16.msra.mxu0 0
      %2619 = vmatprep.subr.bf16.mxu0 0
      %2620 = vmatpush2.bf16.msra.mxu0 0
      %2621 = vmatprep.mubr.bf16.mxu0 0
      %2622 = vmatmul.mubr.bf16.gmra.mxu0 %v2189
      %v2623 = vpop.f32.mrf.mxu0
      %v2624 = vadd.f32 %v2269, %v2623
      %v2625 = vpop.f32.mrf.mxu0
      %v2626 = vadd.f32 %v2273, %v2625
      %v2627 = vpop.f32.mrf.mxu0
      %v2628 = vadd.f32 %v2269, %v2627
      %v2629 = vpop.f32.mrf.mxu0
      %v2630 = vadd.f32 %v2273, %v2629
      %2631 = vmatprep.mubr.bf16.mxu0 0
      %2632 = vmatmul.mubr.bf16.gmra.mxu0 %v2190
      %v2633 = vpop.f32.mrf.mxu0
      %v2634 = vadd.f32 %v2269, %v2633
      %v2635 = vpop.f32.mrf.mxu0
      %v2636 = vadd.f32 %v2273, %v2635
      %v2637 = vpop.f32.mrf.mxu0
      %v2638 = vadd.f32 %v2269, %v2637
      %v2639 = vpop.f32.mrf.mxu0
      %v2640 = vadd.f32 %v2273, %v2639
      %2641 = vmatprep.mubr.bf16.mxu0 0
      %2642 = vmatmul.mubr.bf16.gmra.mxu0 %v2191
      %v2643 = vpop.f32.mrf.mxu0
      %v2644 = vadd.f32 %v2269, %v2643
      %v2645 = vpop.f32.mrf.mxu0
      %v2646 = vadd.f32 %v2273, %v2645
      %v2647 = vpop.f32.mrf.mxu0
      %v2648 = vadd.f32 %v2269, %v2647
      %v2649 = vpop.f32.mrf.mxu0
      %v2650 = vadd.f32 %v2273, %v2649
      %2651 = vmatprep.mubr.bf16.mxu0 0
      %2652 = vmatmul.mubr.bf16.gmra.mxu0 %v2192
      %v2653 = vpop.f32.mrf.mxu0
      %v2654 = vadd.f32 %v2269, %v2653
      %v2655 = vpop.f32.mrf.mxu0
      %v2656 = vadd.f32 %v2273, %v2655
      %v2657 = vpop.f32.mrf.mxu0
      %v2658 = vadd.f32 %v2269, %v2657
      %v2659 = vpop.f32.mrf.mxu0
      %v2660 = vadd.f32 %v2273, %v2659
      %2661 = vmatprep.mubr.bf16.mxu0 0
      %2662 = vmatmul.mubr.bf16.gmra.mxu0 %v2193
      %v2663 = vpop.f32.mrf.mxu0
      %v2664 = vadd.f32 %v2269, %v2663
      %v2665 = vpop.f32.mrf.mxu0
      %v2666 = vadd.f32 %v2273, %v2665
      %v2667 = vpop.f32.mrf.mxu0
      %v2668 = vadd.f32 %v2269, %v2667
      %v2669 = vpop.f32.mrf.mxu0
      %v2670 = vadd.f32 %v2273, %v2669
      %2671 = vmatprep.mubr.bf16.mxu0 0
      %2672 = vmatmul.mubr.bf16.gmra.mxu0 %v2194
      %v2673 = vpop.f32.mrf.mxu0
      %v2674 = vadd.f32 %v2269, %v2673
      %v2675 = vpop.f32.mrf.mxu0
      %v2676 = vadd.f32 %v2273, %v2675
      %v2677 = vpop.f32.mrf.mxu0
      %v2678 = vadd.f32 %v2269, %v2677
      %v2679 = vpop.f32.mrf.mxu0
      %v2680 = vadd.f32 %v2273, %v2679
      %2681 = vmatprep.mubr.bf16.mxu0 0
      %2682 = vmatmul.mubr.bf16.gmra.mxu0 %v2195
      %v2683 = vpop.f32.mrf.mxu0
      %v2684 = vadd.f32 %v2269, %v2683
      %v2685 = vpop.f32.mrf.mxu0
      %v2686 = vadd.f32 %v2273, %v2685
      %v2687 = vpop.f32.mrf.mxu0
      %v2688 = vadd.f32 %v2269, %v2687
      %v2689 = vpop.f32.mrf.mxu0
      %v2690 = vadd.f32 %v2273, %v2689
      %2691 = vmatprep.mubr.bf16.mxu0 0
      %2692 = vmatmul.mubr.bf16.gmra.mxu0 %v2196
      %v2693 = vpop.f32.mrf.mxu0
      %v2694 = vadd.f32 %v2269, %v2693
      %v2695 = vpop.f32.mrf.mxu0
      %v2696 = vadd.f32 %v2273, %v2695
      %v2697 = vpop.f32.mrf.mxu0
      %v2698 = vadd.f32 %v2269, %v2697
      %v2699 = vpop.f32.mrf.mxu0
      %v2700 = vadd.f32 %v2273, %v2699
      %2701 = vdwg.mxu0
      %2702 = vmatprep.subr.bf16.mxu0 %v2529
      %2703 = vmatpush1.bf16.msra.mxu0 %v2528
      %2704 = vmatprep.subr.bf16.mxu0 %v2522
      %2705 = vmatpush1.bf16.msra.mxu0 %v2521
      %2706 = vmatprep.subr.bf16.mxu0 %v2515
      %2707 = vmatpush1.bf16.msra.mxu0 %v2514
      %2708 = vmatprep.subr.bf16.mxu0 %v2508
      %2709 = vmatpush1.bf16.msra.mxu0 %v2507
      %2710 = vmatprep.subr.bf16.mxu0 %v2501
      %2711 = vmatpush1.bf16.msra.mxu0 %v2500
      %2712 = vmatprep.subr.bf16.mxu0 %v2494
      %2713 = vmatpush1.bf16.msra.mxu0 %v2493
      %2714 = vmatprep.subr.bf16.mxu0 %v2487
      %2715 = vmatpush1.bf16.msra.mxu0 %v2486
      %2716 = vmatprep.subr.bf16.mxu0 %v2480
      %2717 = vmatpush1.bf16.msra.mxu0 %v2479
      %2718 = vmatprep.subr.bf16.mxu0 0
      %2719 = vmatpush2.bf16.msra.mxu0 0
      %2720 = vmatprep.subr.bf16.mxu0 0
      %2721 = vmatpush2.bf16.msra.mxu0 0
      %2722 = vmatprep.subr.bf16.mxu0 0
      %2723 = vmatpush2.bf16.msra.mxu0 0
      %2724 = vmatprep.subr.bf16.mxu0 0
      %2725 = vmatpush2.bf16.msra.mxu0 0
      %2726 = vmatprep.subr.bf16.mxu0 0
      %2727 = vmatpush2.bf16.msra.mxu0 0
      %2728 = vmatprep.subr.bf16.mxu0 0
      %2729 = vmatpush2.bf16.msra.mxu0 0
      %2730 = vmatprep.subr.bf16.mxu0 0
      %2731 = vmatpush2.bf16.msra.mxu0 0
      %2732 = vmatprep.subr.bf16.mxu0 0
      %2733 = vmatpush2.bf16.msra.mxu0 0
      %2734 = vmatprep.mubr.bf16.mxu0 0
      %2735 = vmatmul.mubr.bf16.gmra.mxu0 %v2189
      %v2736 = vpop.f32.mrf.mxu0
      %v2737 = vadd.f32 %v2277, %v2736
      %v2738 = vpop.f32.mrf.mxu0
      %v2739 = vadd.f32 %v2281, %v2738
      %v2740 = vpop.f32.mrf.mxu0
      %v2741 = vadd.f32 %v2277, %v2740
      %v2742 = vpop.f32.mrf.mxu0
      %v2743 = vadd.f32 %v2281, %v2742
      %2744 = vmatprep.mubr.bf16.mxu0 0
      %2745 = vmatmul.mubr.bf16.gmra.mxu0 %v2190
      %v2746 = vpop.f32.mrf.mxu0
      %v2747 = vadd.f32 %v2277, %v2746
      %v2748 = vpop.f32.mrf.mxu0
      %v2749 = vadd.f32 %v2281, %v2748
      %v2750 = vpop.f32.mrf.mxu0
      %v2751 = vadd.f32 %v2277, %v2750
      %v2752 = vpop.f32.mrf.mxu0
      %v2753 = vadd.f32 %v2281, %v2752
      %2754 = vmatprep.mubr.bf16.mxu0 0
      %2755 = vmatmul.mubr.bf16.gmra.mxu0 %v2191
      %v2756 = vpop.f32.mrf.mxu0
      %v2757 = vadd.f32 %v2277, %v2756
      %v2758 = vpop.f32.mrf.mxu0
      %v2759 = vadd.f32 %v2281, %v2758
      %v2760 = vpop.f32.mrf.mxu0
      %v2761 = vadd.f32 %v2277, %v2760
      %v2762 = vpop.f32.mrf.mxu0
      %v2763 = vadd.f32 %v2281, %v2762
      %2764 = vmatprep.mubr.bf16.mxu0 0
      %2765 = vmatmul.mubr.bf16.gmra.mxu0 %v2192
      %v2766 = vpop.f32.mrf.mxu0
      %v2767 = vadd.f32 %v2277, %v2766
      %v2768 = vpop.f32.mrf.mxu0
      %v2769 = vadd.f32 %v2281, %v2768
      %v2770 = vpop.f32.mrf.mxu0
      %v2771 = vadd.f32 %v2277, %v2770
      %v2772 = vpop.f32.mrf.mxu0
      %v2773 = vadd.f32 %v2281, %v2772
      %2774 = vmatprep.mubr.bf16.mxu0 0
      %2775 = vmatmul.mubr.bf16.gmra.mxu0 %v2193
      %v2776 = vpop.f32.mrf.mxu0
      %v2777 = vadd.f32 %v2277, %v2776
      %v2778 = vpop.f32.mrf.mxu0
      %v2779 = vadd.f32 %v2281, %v2778
      %v2780 = vpop.f32.mrf.mxu0
      %v2781 = vadd.f32 %v2277, %v2780
      %v2782 = vpop.f32.mrf.mxu0
      %v2783 = vadd.f32 %v2281, %v2782
      %2784 = vmatprep.mubr.bf16.mxu0 0
      %2785 = vmatmul.mubr.bf16.gmra.mxu0 %v2194
      %v2786 = vpop.f32.mrf.mxu0
      %v2787 = vadd.f32 %v2277, %v2786
      %v2788 = vpop.f32.mrf.mxu0
      %v2789 = vadd.f32 %v2281, %v2788
      %v2790 = vpop.f32.mrf.mxu0
      %v2791 = vadd.f32 %v2277, %v2790
      %v2792 = vpop.f32.mrf.mxu0
      %v2793 = vadd.f32 %v2281, %v2792
      %2794 = vmatprep.mubr.bf16.mxu0 0
      %2795 = vmatmul.mubr.bf16.gmra.mxu0 %v2195
      %v2796 = vpop.f32.mrf.mxu0
      %v2797 = vadd.f32 %v2277, %v2796
      %v2798 = vpop.f32.mrf.mxu0
      %v2799 = vadd.f32 %v2281, %v2798
      %v2800 = vpop.f32.mrf.mxu0
      %v2801 = vadd.f32 %v2277, %v2800
      %v2802 = vpop.f32.mrf.mxu0
      %v2803 = vadd.f32 %v2281, %v2802
      %2804 = vmatprep.mubr.bf16.mxu0 0
      %2805 = vmatmul.mubr.bf16.gmra.mxu0 %v2196
      %v2806 = vpop.f32.mrf.mxu0
      %v2807 = vadd.f32 %v2277, %v2806
      %v2808 = vpop.f32.mrf.mxu0
      %v2809 = vadd.f32 %v2281, %v2808
      %v2810 = vpop.f32.mrf.mxu0
      %v2811 = vadd.f32 %v2277, %v2810
      %v2812 = vpop.f32.mrf.mxu0
      %v2813 = vadd.f32 %v2281, %v2812
      %2814 = vdwg.mxu0
      %2815 = vmatprep.subr.bf16.mxu0 %v2531
      %2816 = vmatpush1.bf16.msra.mxu0 %v2530
      %2817 = vmatprep.subr.bf16.mxu0 %v2524
      %2818 = vmatpush1.bf16.msra.mxu0 %v2523
      %2819 = vmatprep.subr.bf16.mxu0 %v2517
      %2820 = vmatpush1.bf16.msra.mxu0 %v2516
      %2821 = vmatprep.subr.bf16.mxu0 %v2510
      %2822 = vmatpush1.bf16.msra.mxu0 %v2509
      %2823 = vmatprep.subr.bf16.mxu0 %v2503
      %2824 = vmatpush1.bf16.msra.mxu0 %v2502
      %2825 = vmatprep.subr.bf16.mxu0 %v2496
      %2826 = vmatpush1.bf16.msra.mxu0 %v2495
      %2827 = vmatprep.subr.bf16.mxu0 %v2489
      %2828 = vmatpush1.bf16.msra.mxu0 %v2488
      %2829 = vmatprep.subr.bf16.mxu0 %v2482
      %2830 = vmatpush1.bf16.msra.mxu0 %v2481
      %2831 = vmatprep.subr.bf16.mxu0 0
      %2832 = vmatpush2.bf16.msra.mxu0 0
      %2833 = vmatprep.subr.bf16.mxu0 0
      %2834 = vmatpush2.bf16.msra.mxu0 0
      %2835 = vmatprep.subr.bf16.mxu0 0
      %2836 = vmatpush2.bf16.msra.mxu0 0
      %2837 = vmatprep.subr.bf16.mxu0 0
      %2838 = vmatpush2.bf16.msra.mxu0 0
      %2839 = vmatprep.subr.bf16.mxu0 0
      %2840 = vmatpush2.bf16.msra.mxu0 0
      %2841 = vmatprep.subr.bf16.mxu0 0
      %2842 = vmatpush2.bf16.msra.mxu0 0
      %2843 = vmatprep.subr.bf16.mxu0 0
      %2844 = vmatpush2.bf16.msra.mxu0 0
      %2845 = vmatprep.subr.bf16.mxu0 0
      %2846 = vmatpush2.bf16.msra.mxu0 0
      %2847 = vmatprep.mubr.bf16.mxu0 0
      %2848 = vmatmul.mubr.bf16.gmra.mxu0 %v2189
      %v2849 = vpop.f32.mrf.mxu0
      %v2850 = vadd.f32 %v2285, %v2849
      %v2851 = vpop.f32.mrf.mxu0
      %v2852 = vadd.f32 %v2289, %v2851
      %v2853 = vpop.f32.mrf.mxu0
      %v2854 = vadd.f32 %v2285, %v2853
      %v2855 = vpop.f32.mrf.mxu0
      %v2856 = vadd.f32 %v2289, %v2855
      %2857 = vmatprep.mubr.bf16.mxu0 0
      %2858 = vmatmul.mubr.bf16.gmra.mxu0 %v2190
      %v2859 = vpop.f32.mrf.mxu0
      %v2860 = vadd.f32 %v2285, %v2859
      %v2861 = vpop.f32.mrf.mxu0
      %v2862 = vadd.f32 %v2289, %v2861
      %v2863 = vpop.f32.mrf.mxu0
      %v2864 = vadd.f32 %v2285, %v2863
      %v2865 = vpop.f32.mrf.mxu0
      %v2866 = vadd.f32 %v2289, %v2865
      %2867 = vmatprep.mubr.bf16.mxu0 0
      %2868 = vmatmul.mubr.bf16.gmra.mxu0 %v2191
      %v2869 = vpop.f32.mrf.mxu0
      %v2870 = vadd.f32 %v2285, %v2869
      %v2871 = vpop.f32.mrf.mxu0
      %v2872 = vadd.f32 %v2289, %v2871
      %v2873 = vpop.f32.mrf.mxu0
      %v2874 = vadd.f32 %v2285, %v2873
      %v2875 = vpop.f32.mrf.mxu0
      %v2876 = vadd.f32 %v2289, %v2875
      %2877 = vmatprep.mubr.bf16.mxu0 0
      %2878 = vmatmul.mubr.bf16.gmra.mxu0 %v2192
      %v2879 = vpop.f32.mrf.mxu0
      %v2880 = vadd.f32 %v2285, %v2879
      %v2881 = vpop.f32.mrf.mxu0
      %v2882 = vadd.f32 %v2289, %v2881
      %v2883 = vpop.f32.mrf.mxu0
      %v2884 = vadd.f32 %v2285, %v2883
      %v2885 = vpop.f32.mrf.mxu0
      %v2886 = vadd.f32 %v2289, %v2885
      %2887 = vmatprep.mubr.bf16.mxu0 0
      %2888 = vmatmul.mubr.bf16.gmra.mxu0 %v2193
      %v2889 = vpop.f32.mrf.mxu0
      %v2890 = vadd.f32 %v2285, %v2889
      %v2891 = vpop.f32.mrf.mxu0
      %v2892 = vadd.f32 %v2289, %v2891
      %v2893 = vpop.f32.mrf.mxu0
      %v2894 = vadd.f32 %v2285, %v2893
      %v2895 = vpop.f32.mrf.mxu0
      %v2896 = vadd.f32 %v2289, %v2895
      %2897 = vmatprep.mubr.bf16.mxu0 0
      %2898 = vmatmul.mubr.bf16.gmra.mxu0 %v2194
      %v2899 = vpop.f32.mrf.mxu0
      %v2900 = vadd.f32 %v2285, %v2899
      %v2901 = vpop.f32.mrf.mxu0
      %v2902 = vadd.f32 %v2289, %v2901
      %v2903 = vpop.f32.mrf.mxu0
      %v2904 = vadd.f32 %v2285, %v2903
      %v2905 = vpop.f32.mrf.mxu0
      %v2906 = vadd.f32 %v2289, %v2905
      %2907 = vmatprep.mubr.bf16.mxu0 0
      %2908 = vmatmul.mubr.bf16.gmra.mxu0 %v2195
      %v2909 = vpop.f32.mrf.mxu0
      %v2910 = vadd.f32 %v2285, %v2909
      %v2911 = vpop.f32.mrf.mxu0
      %v2912 = vadd.f32 %v2289, %v2911
      %v2913 = vpop.f32.mrf.mxu0
      %v2914 = vadd.f32 %v2285, %v2913
      %v2915 = vpop.f32.mrf.mxu0
      %v2916 = vadd.f32 %v2289, %v2915
      %2917 = vmatprep.mubr.bf16.mxu0 0
      %2918 = vmatmul.mubr.bf16.gmra.mxu0 %v2196
      %v2919 = vpop.f32.mrf.mxu0
      %v2920 = vadd.f32 %v2285, %v2919
      %v2921 = vpop.f32.mrf.mxu0
      %v2922 = vadd.f32 %v2289, %v2921
      %v2923 = vpop.f32.mrf.mxu0
      %v2924 = vadd.f32 %v2285, %v2923
      %v2925 = vpop.f32.mrf.mxu0
      %v2926 = vadd.f32 %v2289, %v2925
      %2927 = vdwg.mxu0
      %2928 = vmatprep.subr.bf16.mxu0 0
      %2929 = vmatpush1.bf16.msra.mxu0 %v2532
      %2930 = vmatprep.subr.bf16.mxu0 0
      %2931 = vmatpush1.bf16.msra.mxu0 %v2525
      %2932 = vmatprep.subr.bf16.mxu0 0
      %2933 = vmatpush1.bf16.msra.mxu0 %v2518
      %2934 = vmatprep.subr.bf16.mxu0 0
      %2935 = vmatpush1.bf16.msra.mxu0 %v2511
      %2936 = vmatprep.subr.bf16.mxu0 0
      %2937 = vmatpush1.bf16.msra.mxu0 %v2504
      %2938 = vmatprep.subr.bf16.mxu0 0
      %2939 = vmatpush1.bf16.msra.mxu0 %v2497
      %2940 = vmatprep.subr.bf16.mxu0 0
      %2941 = vmatpush1.bf16.msra.mxu0 %v2490
      %2942 = vmatprep.subr.bf16.mxu0 0
      %2943 = vmatpush1.bf16.msra.mxu0 %v2483
      %2944 = vmatprep.subr.bf16.mxu0 0
      %2945 = vmatpush2.bf16.msra.mxu0 0
      %2946 = vmatprep.subr.bf16.mxu0 0
      %2947 = vmatpush2.bf16.msra.mxu0 0
      %2948 = vmatprep.subr.bf16.mxu0 0
      %2949 = vmatpush2.bf16.msra.mxu0 0
      %2950 = vmatprep.subr.bf16.mxu0 0
      %2951 = vmatpush2.bf16.msra.mxu0 0
      %2952 = vmatprep.subr.bf16.mxu0 0
      %2953 = vmatpush2.bf16.msra.mxu0 0
      %2954 = vmatprep.subr.bf16.mxu0 0
      %2955 = vmatpush2.bf16.msra.mxu0 0
      %2956 = vmatprep.subr.bf16.mxu0 0
      %2957 = vmatpush2.bf16.msra.mxu0 0
      %2958 = vmatprep.subr.bf16.mxu0 0
      %2959 = vmatpush2.bf16.msra.mxu0 0
      %2960 = vmatprep.mubr.bf16.mxu0 0
      %2961 = vmatmul.mubr.bf16.gmra.mxu0 %v2189
      %v2962 = vpop.f32.mrf.mxu0
      %v2963 = vadd.f32 %v2293, %v2962
      %v2964 = vpop.f32.mrf.mxu0
      %v2965 = vpop.f32.mrf.mxu0
      %v2966 = vadd.f32 %v2293, %v2965
      %v2967 = vpop.f32.mrf.mxu0
      %2968 = vmatprep.mubr.bf16.mxu0 0
      %2969 = vmatmul.mubr.bf16.gmra.mxu0 %v2190
      %v2970 = vpop.f32.mrf.mxu0
      %v2971 = vadd.f32 %v2293, %v2970
      %v2972 = vpop.f32.mrf.mxu0
      %v2973 = vpop.f32.mrf.mxu0
      %v2974 = vadd.f32 %v2293, %v2973
      %v2975 = vpop.f32.mrf.mxu0
      %2976 = vmatprep.mubr.bf16.mxu0 0
      %2977 = vmatmul.mubr.bf16.gmra.mxu0 %v2191
      %v2978 = vpop.f32.mrf.mxu0
      %v2979 = vadd.f32 %v2293, %v2978
      %v2980 = vpop.f32.mrf.mxu0
      %v2981 = vpop.f32.mrf.mxu0
      %v2982 = vadd.f32 %v2293, %v2981
      %v2983 = vpop.f32.mrf.mxu0
      %2984 = vmatprep.mubr.bf16.mxu0 0
      %2985 = vmatmul.mubr.bf16.gmra.mxu0 %v2192
      %v2986 = vpop.f32.mrf.mxu0
      %v2987 = vadd.f32 %v2293, %v2986
      %v2988 = vpop.f32.mrf.mxu0
      %v2989 = vpop.f32.mrf.mxu0
      %v2990 = vadd.f32 %v2293, %v2989
      %v2991 = vpop.f32.mrf.mxu0
      %2992 = vmatprep.mubr.bf16.mxu0 0
      %2993 = vmatmul.mubr.bf16.gmra.mxu0 %v2193
      %v2994 = vpop.f32.mrf.mxu0
      %v2995 = vadd.f32 %v2293, %v2994
      %v2996 = vpop.f32.mrf.mxu0
      %v2997 = vpop.f32.mrf.mxu0
      %v2998 = vadd.f32 %v2293, %v2997
      %v2999 = vpop.f32.mrf.mxu0
      %3000 = vmatprep.mubr.bf16.mxu0 0
      %3001 = vmatmul.mubr.bf16.gmra.mxu0 %v2194
      %v3002 = vpop.f32.mrf.mxu0
      %v3003 = vadd.f32 %v2293, %v3002
      %v3004 = vpop.f32.mrf.mxu0
      %v3005 = vpop.f32.mrf.mxu0
      %v3006 = vadd.f32 %v2293, %v3005
      %v3007 = vpop.f32.mrf.mxu0
      %3008 = vmatprep.mubr.bf16.mxu0 0
      %3009 = vmatmul.mubr.bf16.gmra.mxu0 %v2195
      %v3010 = vpop.f32.mrf.mxu0
      %v3011 = vadd.f32 %v2293, %v3010
      %v3012 = vpop.f32.mrf.mxu0
      %v3013 = vpop.f32.mrf.mxu0
      %v3014 = vadd.f32 %v2293, %v3013
      %v3015 = vpop.f32.mrf.mxu0
      %3016 = vmatprep.mubr.bf16.mxu0 0
      %3017 = vmatmul.mubr.bf16.gmra.mxu0 %v2196
      %v3018 = vpop.f32.mrf.mxu0
      %v3019 = vadd.f32 %v2293, %v3018
      %v3020 = vpop.f32.mrf.mxu0
      %v3021 = vpop.f32.mrf.mxu0
      %v3022 = vadd.f32 %v2293, %v3021
      %v3023 = vpop.f32.mrf.mxu0
      %3024 = vdwg.mxu0
      %3025 = vst [vmem:[%s339] sm:$0xff] %v2624
      %3026 = vst [vmem:[%s339 + $0x8] sm:$0xff] %v2626
      %3027 = vst [vmem:[%s339 + $0x10] sm:$0xff] %v2737
      %3028 = vst [vmem:[%s339 + $0x18] sm:$0xff] %v2739
      %3029 = vst [vmem:[%s339 + $0x20] sm:$0xff] %v2850
      %3030 = vst [vmem:[%s339 + $0x28] sm:$0xff] %v2852
      %3031 = vst.msk [vmem:[%s339 + $0x30] sm:$0xff] %vm903, %v2963
      %3032 = vst [vmem:[%s339 + $0x38] sm:$0xff] %v2628
      %3033 = vst [vmem:[%s339 + $0x40] sm:$0xff] %v2630
      %3034 = vst [vmem:[%s339 + $0x48] sm:$0xff] %v2741
      %3035 = vst [vmem:[%s339 + $0x50] sm:$0xff] %v2743
      %3036 = vst [vmem:[%s339 + $0x58] sm:$0xff] %v2854
      %3037 = vst [vmem:[%s339 + $0x60] sm:$0xff] %v2856
      %3038 = vst.msk [vmem:[%s339 + $0x68] sm:$0xff] %vm903, %v2966
      %3039 = vst [vmem:[%s339 + $0x70] sm:$0xff] %v2634
      %3040 = vst [vmem:[%s339 + $0x78] sm:$0xff] %v2636
      %3041 = vst [vmem:[%s339 + $0x80] sm:$0xff] %v2747
      %3042 = vst [vmem:[%s339 + $0x88] sm:$0xff] %v2749
      %3043 = vst [vmem:[%s339 + $0x90] sm:$0xff] %v2860
      %3044 = vst [vmem:[%s339 + $0x98] sm:$0xff] %v2862
      %3045 = vst.msk [vmem:[%s339 + $0xa0] sm:$0xff] %vm903, %v2971
      %3046 = vst [vmem:[%s339 + $0xa8] sm:$0xff] %v2638
      %3047 = vst [vmem:[%s339 + $0xb0] sm:$0xff] %v2640
      %3048 = vst [vmem:[%s339 + $0xb8] sm:$0xff] %v2751
      %3049 = vst [vmem:[%s339 + $0xc0] sm:$0xff] %v2753
      %3050 = vst [vmem:[%s339 + $0xc8] sm:$0xff] %v2864
      %3051 = vst [vmem:[%s339 + $0xd0] sm:$0xff] %v2866
      %3052 = vst.msk [vmem:[%s339 + $0xd8] sm:$0xff] %vm903, %v2974
      %3053 = vst [vmem:[%s339 + $0xe0] sm:$0xff] %v2644
      %3054 = vst [vmem:[%s339 + $0xe8] sm:$0xff] %v2646
      %3055 = vst [vmem:[%s339 + $0xf0] sm:$0xff] %v2757
      %3056 = vst [vmem:[%s339 + $0xf8] sm:$0xff] %v2759
      %3057 = vst [vmem:[%s339 + $0x100] sm:$0xff] %v2870
      %3058 = vst [vmem:[%s339 + $0x108] sm:$0xff] %v2872
      %3059 = vst.msk [vmem:[%s339 + $0x110] sm:$0xff] %vm903, %v2979
      %3060 = vst [vmem:[%s339 + $0x118] sm:$0xff] %v2648
      %3061 = vst [vmem:[%s339 + $0x120] sm:$0xff] %v2650
      %3062 = vst [vmem:[%s339 + $0x128] sm:$0xff] %v2761
      %3063 = vst [vmem:[%s339 + $0x130] sm:$0xff] %v2763
      %3064 = vst [vmem:[%s339 + $0x138] sm:$0xff] %v2874
      %3065 = vst [vmem:[%s339 + $0x140] sm:$0xff] %v2876
      %3066 = vst.msk [vmem:[%s339 + $0x148] sm:$0xff] %vm903, %v2982
      %3067 = vst [vmem:[%s339 + $0x150] sm:$0xff] %v2654
      %3068 = vst [vmem:[%s339 + $0x158] sm:$0xff] %v2656
      %3069 = vst [vmem:[%s339 + $0x160] sm:$0xff] %v2767
      %3070 = vst [vmem:[%s339 + $0x168] sm:$0xff] %v2769
      %3071 = vst [vmem:[%s339 + $0x170] sm:$0xff] %v2880
      %3072 = vst [vmem:[%s339 + $0x178] sm:$0xff] %v2882
      %3073 = vst.msk [vmem:[%s339 + $0x180] sm:$0xff] %vm903, %v2987
      %3074 = vst [vmem:[%s339 + $0x188] sm:$0xff] %v2658
      %3075 = vst [vmem:[%s339 + $0x190] sm:$0xff] %v2660
      %3076 = vst [vmem:[%s339 + $0x198] sm:$0xff] %v2771
      %3077 = vst [vmem:[%s339 + $0x1a0] sm:$0xff] %v2773
      %3078 = vst [vmem:[%s339 + $0x1a8] sm:$0xff] %v2884
      %3079 = vst [vmem:[%s339 + $0x1b0] sm:$0xff] %v2886
      %3080 = vst.msk [vmem:[%s339 + $0x1b8] sm:$0xff] %vm903, %v2990
      %3081 = vst [vmem:[%s339 + $0x1c0] sm:$0xff] %v2664
      %3082 = vst [vmem:[%s339 + $0x1c8] sm:$0xff] %v2666
      %3083 = vst [vmem:[%s339 + $0x1d0] sm:$0xff] %v2777
      %3084 = vst [vmem:[%s339 + $0x1d8] sm:$0xff] %v2779
      %3085 = vst [vmem:[%s339 + $0x1e0] sm:$0xff] %v2890
      %3086 = vst [vmem:[%s339 + $0x1e8] sm:$0xff] %v2892
      %3087 = vst.msk [vmem:[%s339 + $0x1f0] sm:$0xff] %vm903, %v2995
      %3088 = vst [vmem:[%s339 + $0x1f8] sm:$0xff] %v2668
      %3089 = vst [vmem:[%s339 + $0x200] sm:$0xff] %v2670
      %3090 = vst [vmem:[%s339 + $0x208] sm:$0xff] %v2781
      %3091 = vst [vmem:[%s339 + $0x210] sm:$0xff] %v2783
      %3092 = vst [vmem:[%s339 + $0x218] sm:$0xff] %v2894
      %3093 = vst [vmem:[%s339 + $0x220] sm:$0xff] %v2896
      %3094 = vst.msk [vmem:[%s339 + $0x228] sm:$0xff] %vm903, %v2998
      %3095 = vst [vmem:[%s339 + $0x230] sm:$0xff] %v2674
      %3096 = vst [vmem:[%s339 + $0x238] sm:$0xff] %v2676
      %3097 = vst [vmem:[%s339 + $0x240] sm:$0xff] %v2787
      %3098 = vst [vmem:[%s339 + $0x248] sm:$0xff] %v2789
      %3099 = vst [vmem:[%s339 + $0x250] sm:$0xff] %v2900
      %3100 = vst [vmem:[%s339 + $0x258] sm:$0xff] %v2902
      %3101 = vst.msk [vmem:[%s339 + $0x260] sm:$0xff] %vm903, %v3003
      %3102 = vst [vmem:[%s339 + $0x268] sm:$0xff] %v2678
      %3103 = vst [vmem:[%s339 + $0x270] sm:$0xff] %v2680
      %3104 = vst [vmem:[%s339 + $0x278] sm:$0xff] %v2791
      %3105 = vst [vmem:[%s339 + $0x280] sm:$0xff] %v2793
      %3106 = vst [vmem:[%s339 + $0x288] sm:$0xff] %v2904
      %3107 = vst [vmem:[%s339 + $0x290] sm:$0xff] %v2906
      %3108 = vst.msk [vmem:[%s339 + $0x298] sm:$0xff] %vm903, %v3006
      %3109 = vst [vmem:[%s339 + $0x2a0] sm:$0xff] %v2684
      %3110 = vst [vmem:[%s339 + $0x2a8] sm:$0xff] %v2686
      %3111 = vst [vmem:[%s339 + $0x2b0] sm:$0xff] %v2797
      %3112 = vst [vmem:[%s339 + $0x2b8] sm:$0xff] %v2799
      %3113 = vst [vmem:[%s339 + $0x2c0] sm:$0xff] %v2910
      %3114 = vst [vmem:[%s339 + $0x2c8] sm:$0xff] %v2912
      %3115 = vst.msk [vmem:[%s339 + $0x2d0] sm:$0xff] %vm903, %v3011
      %3116 = vst [vmem:[%s339 + $0x2d8] sm:$0xff] %v2688
      %3117 = vst [vmem:[%s339 + $0x2e0] sm:$0xff] %v2690
      %3118 = vst [vmem:[%s339 + $0x2e8] sm:$0xff] %v2801
      %3119 = vst [vmem:[%s339 + $0x2f0] sm:$0xff] %v2803
      %3120 = vst [vmem:[%s339 + $0x2f8] sm:$0xff] %v2914
      %3121 = vst [vmem:[%s339 + $0x300] sm:$0xff] %v2916
      %3122 = vst.msk [vmem:[%s339 + $0x308] sm:$0xff] %vm903, %v3014
      %3123 = vst [vmem:[%s339 + $0x310] sm:$0xff] %v2694
      %3124 = vst [vmem:[%s339 + $0x318] sm:$0xff] %v2696
      %3125 = vst [vmem:[%s339 + $0x320] sm:$0xff] %v2807
      %3126 = vst [vmem:[%s339 + $0x328] sm:$0xff] %v2809
      %3127 = vst [vmem:[%s339 + $0x330] sm:$0xff] %v2920
      %3128 = vst [vmem:[%s339 + $0x338] sm:$0xff] %v2922
      %3129 = vst.msk [vmem:[%s339 + $0x340] sm:$0xff] %vm903, %v3019
      %3130 = vst [vmem:[%s339 + $0x348] sm:$0xff] %v2698
      %3131 = vst [vmem:[%s339 + $0x350] sm:$0xff] %v2700
      %3132 = vst [vmem:[%s339 + $0x358] sm:$0xff] %v2811
      %3133 = vst [vmem:[%s339 + $0x360] sm:$0xff] %v2813
      %3134 = vst [vmem:[%s339 + $0x368] sm:$0xff] %v2924
      %3135 = vst [vmem:[%s339 + $0x370] sm:$0xff] %v2926
      %3136 = vst.msk [vmem:[%s339 + $0x378] sm:$0xff] %vm903, %v3022
      %s3137 = smul.u32 16, %s20
      %p3138 = scmp.lt.s32.totalorder %s3137, 31
      %s3139 = scalar_select %p3138, %s3137, 31
      %s3140 = smul.addr %s3139, 7
      %s3141 = smul.addr %s3140, 8
      %s3142 = scalar_lea.vmem %s9, %s3141
      // Predicated region
      $region57: #{linear_ae_forward.1} parent=55 // pred_check
        %p3143 = pneg %p232
      $region58: #{linear_ae_forward.1} parent=55 // pred_check_branch
        %3145 = sbr.rel (%p3143) target = $region60
      $region59: #{linear_ae_forward.1} parent=55 // pred_region
        %s3146 = smul.u32 16, %s20
      $region60: #{linear_ae_forward.1} parent=55 // pred_fallthru
        _
    $region56: #{linear_ae_forward.1} parent=5 // pred_fallthru
      _
    %p3147 = scmp.le.s32.totalorder 2, %s15
    // Predicated region
    $region61: #{linear_ae_forward.1} parent=5 // pred_check
      %p3148 = pneg %p3147
    $region62: #{linear_ae_forward.1} parent=5 // pred_check_branch
      %3150 = sbr.rel (%p3148) target = $region64
    $region63: #{linear_ae_forward.1} parent=5 // pred_region
      %s3151 = ssub.s32 %s15, 2
      // Predicated region
      $region65: #{linear_ae_forward.1} parent=63 // pred_check
        %p3152 = pneg %p238
      $region66: #{linear_ae_forward.1} parent=63 // pred_check_branch
        %3154 = sbr.rel (%p3152) target = $region68
      $region67: #{linear_ae_forward.1} parent=63 // pred_region
        %s3155 = smul.u32 16, %s21
        %p3156 = scmp.lt.s32.totalorder %s3155, 31
        %s3157 = scalar_select %p3156, %s3155, 31
        %s3158 = smul.addr %s3157, 7
        %s3159 = smul.addr %s3158, 8
        %s3160 = scalar_lea.vmem %s9, %s3159
      $region68: #{linear_ae_forward.1} parent=63 // pred_fallthru
        _
    $region64: #{linear_ae_forward.1} parent=5 // pred_fallthru
      _
  $region6: #{linear_ae_forward.1} parent=0 // loop_footer
    %s19 = sadd.s32 1, %s15
  $region7: #{linear_ae_forward.1} parent=0 // loop_footer_branch
    %14 = sbr.rel target = $region3
  $region8: #{linear_ae_forward.1} parent=0 // loop_exit
    _

</llo_original>
